<compile_context>
chip_gen: v7x
topology: tpu7x:2x2x1
jax: 0.10.0
libtpu: 0.0.40
codegen_flags: <defaults>
</compile_context>

<pallas_src>
import jax
import jax.numpy as jnp
from jax import lax
from jax.experimental import pallas as pl
from jax.experimental.pallas import tpu as pltpu

# ---- small synthetic config (consistent with GPTConfig structure) ----
VOCAB = 256          # vocab_size
BLOCK_SIZE = 16      # block_size
N_LAYER = 2          # n_layer
N_HEAD = 4           # n_head
N_EMBD = 32          # n_embd
HEAD = N_EMBD // N_HEAD
LN_EPS = 1e-5


# ----------------------------- math helpers -----------------------------
def _layernorm(x, g, b):
    mu = jnp.mean(x, axis=-1, keepdims=True)
    var = jnp.mean((x - mu) ** 2, axis=-1, keepdims=True)
    return (x - mu) * lax.rsqrt(var + LN_EPS) * g + b


def _gelu_tanh(x):
    # NOTE: tanh (here) and exp (softmax) share the single EUP; if profiling at
    # real sizes shows the EUP binding, switch to a VPU polynomial approximation.
    c = 0.7978845608028654  # sqrt(2/pi)
    return 0.5 * x * (1.0 + jnp.tanh(c * (x + 0.044715 * x * x * x)))


# ----------------------------- fused GPT forward kernel -----------------------------
# Grid = (B, N_LAYER).  Per step: one batch element through one transformer layer.
# Residual stream (T, C) persists in the x_res VMEM scratch across the layer axis.
def gpt_kernel(x_ref, wqkv_ref, bqkv_ref, wo_ref, wfc_ref, bfc_ref, wmp_ref,
               vec_ref, wte_t_ref, lnf_ref, lmb_ref, o_ref, x_res):
    C, H, D = N_EMBD, N_HEAD, HEAD
    T = x_ref.shape[0]
    bf = jnp.bfloat16
    l = pl.program_id(1)

    @pl.when(l == 0)
    def _():
        x_res[...] = x_ref[...]                     # load residual for this batch

    x = x_res[...]                                  # (T, C) f32

    # Per-layer LN / bias slab: row-indexed (sublane slices only, no lane extracts).
    ln1_g, ln1_b = vec_ref[0:1, :], vec_ref[1:2, :]
    b_ap = vec_ref[2:3, :]
    ln2_g, ln2_b = vec_ref[3:4, :], vec_ref[4:5, :]
    b_mp = vec_ref[5:6, :]

    # --- causal self-attention (CasualSelfAttention semantics), heads fused ---
    h = _layernorm(x, ln1_g, ln1_b).astype(bf)      # bf16 cast once
    h_b = jnp.broadcast_to(h, (H, T, C))            # shared LHS for batched head matmuls

    q = jnp.einsum('htc,hcd->htd', h_b, wqkv_ref[0:H],
                   preferred_element_type=jnp.float32) + bqkv_ref[0:H]
    k = jnp.einsum('htc,hcd->htd', h_b, wqkv_ref[H:2 * H],
                   preferred_element_type=jnp.float32) + bqkv_ref[H:2 * H]
    v = jnp.einsum('htc,hcd->htd', h_b, wqkv_ref[2 * H:3 * H],
                   preferred_element_type=jnp.float32) + bqkv_ref[2 * H:3 * H]

    s = jnp.einsum('hqd,hkd->hqk', q.astype(bf), k.astype(bf),
                   preferred_element_type=jnp.float32) * jnp.float32(1.0 / (D ** 0.5))
    rr = lax.broadcasted_iota(jnp.int32, (T, T), 0)
    cc = lax.broadcasted_iota(jnp.int32, (T, T), 1)
    s = jnp.where(cc <= rr, s, jnp.float32(-1e30))  # plain (T, T) causal mask
    s = s - jnp.max(s, axis=-1, keepdims=True)
    p = jnp.exp(s)
    p = p / jnp.sum(p, axis=-1, keepdims=True)      # exact softmax (matches reference)
    y = jnp.einsum('hqk,hkd->hqd', p.astype(bf), v.astype(bf),
                   preferred_element_type=jnp.float32)          # (H, T, D)

    # Output projection with head-major weights: one batched matmul + head-sum,
    # instead of a lane concatenate followed by a (T, C) x (C, C) matmul.
    attn = jnp.einsum('htd,hdc->htc', y.astype(bf), wo_ref[...],
                      preferred_element_type=jnp.float32)       # (H, T, C)
    x = x + jnp.sum(attn, axis=0) + b_ap

    # --- MLP ---
    h2 = _layernorm(x, ln2_g, ln2_b).astype(bf)
    f = _gelu_tanh(jnp.dot(h2, wfc_ref[...],
                           preferred_element_type=jnp.float32) + bfc_ref[...])
    x = x + jnp.dot(f.astype(bf), wmp_ref[...],
                    preferred_element_type=jnp.float32) + b_mp

    x_res[...] = x

    # --- final LayerNorm + tied lm_head (only on the last layer step) ---
    @pl.when(l == pl.num_programs(1) - 1)
    def _():
        hf = _layernorm(x, lnf_ref[0:1, :], lnf_ref[1:2, :]).astype(bf)
        o_ref[...] = jnp.dot(hf, wte_t_ref[...],
                             preferred_element_type=jnp.float32) + lmb_ref[...]


# ----------------------------- parameter packing (host-side glue) -----------------------------
def pack_params(params):
    """Pack per-layer params into layer-indexed, head-major, row-per-vector slabs."""
    C, H, D = N_EMBD, N_HEAD, HEAD
    layers = params['layers']

    def heads_in(w):     # (C, n*C) -> (n*H, C, D) head-major input-side weights
        n = w.shape[1] // C
        return jnp.concatenate(
            [w[:, j * C:(j + 1) * C].reshape(C, H, D).transpose(1, 0, 2)
             for j in range(n)], axis=0)

    def heads_bias(b):   # (1, n*C) -> (n*H, 1, D)
        n = b.shape[1] // C
        return jnp.concatenate(
            [b[0, j * C:(j + 1) * C].reshape(H, 1, D) for j in range(n)], axis=0)

    wqkv = jnp.stack([heads_in(L['w_qkv']) for L in layers]).astype(jnp.bfloat16)        # (L,3H,C,D)
    bqkv = jnp.stack([heads_bias(L['b_qkv']) for L in layers]).astype(jnp.float32)       # (L,3H,1,D)
    wo = jnp.stack([L['w_ap'].reshape(H, D, C) for L in layers]).astype(jnp.bfloat16)    # (L,H,D,C)
    wfc = jnp.stack([L['w_fc'] for L in layers]).astype(jnp.bfloat16)                    # (L,C,4C)
    bfc = jnp.stack([L['b_fc'] for L in layers]).astype(jnp.float32)                     # (L,1,4C)
    wmp = jnp.stack([L['w_mp'] for L in layers]).astype(jnp.bfloat16)                    # (L,4C,C)
    vec = jnp.stack([jnp.concatenate(
        [L['ln1_g'], L['ln1_b'], L['b_ap'], L['ln2_g'], L['ln2_b'], L['b_mp']],
        axis=0) for L in layers]).astype(jnp.float32)                                    # (L,6,C)
    wte_t = params['wte'].T.astype(jnp.bfloat16)                                         # (C,V) tied head
    lnf = jnp.concatenate([params['ln_f_g'], params['ln_f_b']], axis=0)                  # (2,C)
    lmb = params['lm_b']                                                                 # (1,V)
    return wqkv, bqkv, wo, wfc, bfc, wmp, vec, wte_t, lnf, lmb


# ----------------------------- full forward -----------------------------
def gpt_forward(idx, params):
    B, T = idx.shape
    assert T <= BLOCK_SIZE
    C, V = N_EMBD, VOCAB
    tok = jnp.take(params['wte'], idx, axis=0)           # embedding gather (glue)
    pos = params['wpe'][:T][None, :, :]
    x = (tok + pos).astype(jnp.float32)                  # (B, T, C)

    wqkv, bqkv, wo, wfc, bfc, wmp, vec, wte_t, lnf, lmb = pack_params(params)

    def layer_spec(a):
        # Leading (layer) dim squeezed; index_map streams layer l's slab.
        n_trail = a.ndim - 1

        def imap(b, l):
            return (l,) + (0,) * n_trail
        return pl.BlockSpec((None,) + a.shape[1:], imap)

    def full_spec(a):
        zeros = (0,) * a.ndim

        def imap(b, l):
            return zeros
        return pl.BlockSpec(a.shape, imap)

    in_specs = [
        pl.BlockSpec((None, T, C), lambda b, l: (b, 0, 0)),     # x: per-batch block
        layer_spec(wqkv), layer_spec(bqkv), layer_spec(wo),
        layer_spec(wfc), layer_spec(bfc), layer_spec(wmp), layer_spec(vec),
        full_spec(wte_t), full_spec(lnf), full_spec(lmb),
    ]
    out_spec = pl.BlockSpec((None, T, V), lambda b, l: (b, 0, 0))   # V=256: lane-dense

    logits = pl.pallas_call(
        gpt_kernel,
        out_shape=jax.ShapeDtypeStruct((B, T, V), jnp.float32),
        grid_spec=pltpu.PrefetchScalarGridSpec(
            num_scalar_prefetch=0,
            grid=(B, N_LAYER),                     # batch: parallel, layers: carried
            in_specs=in_specs,
            out_specs=out_spec,
            scratch_shapes=[pltpu.VMEM((T, C), jnp.float32)]),   # residual stream
        compiler_params=pltpu.CompilerParams(
            dimension_semantics=("parallel", "arbitrary"),
            # Explicit scoped-VMEM budget (review items 8/9).  At real sizes tune
            # per chip: ~96-110 MiB on v6e, <=~48 MiB on v7x, 128-tiles on v5e.
            vmem_limit_bytes=32 * 1024 * 1024),
    )(x, wqkv, bqkv, wo, wfc, bfc, wmp, vec, wte_t, lnf, lmb)
    return logits


# ----------------------------- parameter init (deterministic) -----------------------------
def init_params(key):
    std = 0.02
    std_proj = 0.02 * (2 * N_LAYER) ** (-0.5)   # NANOGPT_SCALE_INIT
    n_keys = 2 + 4 * N_LAYER
    keys = jax.random.split(key, n_keys)
    ki = iter(range(n_keys))

    params = {}
    params['wte'] = std * jax.random.normal(keys[next(ki)], (VOCAB, N_EMBD), jnp.float32)
    params['wpe'] = std * jax.random.normal(keys[next(ki)], (BLOCK_SIZE, N_EMBD), jnp.float32)
    params['layers'] = []
    for _ in range(N_LAYER):
        layer = dict(
            ln1_g=jnp.ones((1, N_EMBD), jnp.float32),
            ln1_b=jnp.zeros((1, N_EMBD), jnp.float32),
            w_qkv=std * jax.random.normal(keys[next(ki)], (N_EMBD, 3 * N_EMBD), jnp.float32),
            b_qkv=jnp.zeros((1, 3 * N_EMBD), jnp.float32),
            w_ap=std_proj * jax.random.normal(keys[next(ki)], (N_EMBD, N_EMBD), jnp.float32),
            b_ap=jnp.zeros((1, N_EMBD), jnp.float32),
            ln2_g=jnp.ones((1, N_EMBD), jnp.float32),
            ln2_b=jnp.zeros((1, N_EMBD), jnp.float32),
            w_fc=std * jax.random.normal(keys[next(ki)], (N_EMBD, 4 * N_EMBD), jnp.float32),
            b_fc=jnp.zeros((1, 4 * N_EMBD), jnp.float32),
            w_mp=std_proj * jax.random.normal(keys[next(ki)], (4 * N_EMBD, N_EMBD), jnp.float32),
            b_mp=jnp.zeros((1, N_EMBD), jnp.float32),
        )
        params['layers'].append(layer)
    params['ln_f_g'] = jnp.ones((1, N_EMBD), jnp.float32)
    params['ln_f_b'] = jnp.zeros((1, N_EMBD), jnp.float32)
    params['lm_b'] = jnp.zeros((1, VOCAB), jnp.float32)   # lm_head bias (zeros)
    # weight tying: lm_head.weight == wte (handled by reusing params['wte'])
    return params


# ----------------------------- pure-JAX reference (mirrors bf16-at-MXU math) -----------------------------
def gpt_forward_ref(idx, params):
    B, T = idx.shape
    bf, f32 = jnp.bfloat16, jnp.float32

    def mm(a, b):
        return jnp.einsum('...ij,...jk->...ik', a.astype(bf), b.astype(bf),
                          preferred_element_type=f32)

    x = jnp.take(params['wte'], idx, axis=0) + params['wpe'][:T][None]
    for L in params['layers']:
        h = _layernorm(x, L['ln1_g'][0], L['ln1_b'][0])
        qkv = mm(h, L['w_qkv']) + L['b_qkv'][0]
        q, k, v = jnp.split(qkv, 3, axis=-1)
        q = q.reshape(B, T, N_HEAD, HEAD).transpose(0, 2, 1, 3)
        k = k.reshape(B, T, N_HEAD, HEAD).transpose(0, 2, 1, 3)
        v = v.reshape(B, T, N_HEAD, HEAD).transpose(0, 2, 1, 3)
        s = jnp.einsum('bhqd,bhkd->bhqk', q.astype(bf), k.astype(bf),
                       preferred_element_type=f32) / (HEAD ** 0.5)
        mask = jnp.tril(jnp.ones((T, T), bool))
        s = jnp.where(mask, s, -1e30)
        p = jax.nn.softmax(s, axis=-1)
        y = jnp.einsum('bhqk,bhkd->bhqd', p.astype(bf), v.astype(bf),
                       preferred_element_type=f32)
        y = y.transpose(0, 2, 1, 3).reshape(B, T, N_EMBD)
        x = x + mm(y, L['w_ap']) + L['b_ap'][0]
        h2 = _layernorm(x, L['ln2_g'][0], L['ln2_b'][0])
        f = _gelu_tanh(mm(h2, L['w_fc']) + L['b_fc'][0])
        x = x + mm(f, L['w_mp']) + L['b_mp'][0]
    xf = _layernorm(x, params['ln_f_g'][0], params['ln_f_b'][0])
    return mm(xf, params['wte'].T) + params['lm_b'][0]


if __name__ == "__main__":
    key = jax.random.PRNGKey(0)
    pkey, ikey = jax.random.split(key)
    params = init_params(pkey)

    B, T = 2, 8
    idx = jax.random.randint(ikey, (B, T), 0, VOCAB, dtype=jnp.int32)

    logits = gpt_forward(idx, params)
    logits = jax.block_until_ready(logits)

    ref = gpt_forward_ref(idx, params)
    assert logits.shape == (B, T, VOCAB)
    assert bool(jnp.all(jnp.isfinite(logits)))
    assert bool(jnp.allclose(logits, ref, atol=5e-3, rtol=5e-3))

    print("KERNEL_OK")
</pallas_src>

<mosaic_0001>
module attributes {stable_mosaic.version = 11 : i64} {
  func.func @gpt_kernel(%arg0: i32, %arg1: i32, %arg2: memref<1x8x32xf32, #tpu.memory_space<vmem>>, %arg3: memref<1x12x32x8xbf16, #tpu.memory_space<vmem>>, %arg4: memref<1x12x1x8xf32, #tpu.memory_space<vmem>>, %arg5: memref<1x4x8x32xbf16, #tpu.memory_space<vmem>>, %arg6: memref<1x32x128xbf16, #tpu.memory_space<vmem>>, %arg7: memref<1x1x128xf32, #tpu.memory_space<vmem>>, %arg8: memref<1x128x32xbf16, #tpu.memory_space<vmem>>, %arg9: memref<1x6x32xf32, #tpu.memory_space<vmem>>, %arg10: memref<32x256xbf16, #tpu.memory_space<vmem>>, %arg11: memref<2x32xf32, #tpu.memory_space<vmem>>, %arg12: memref<1x256xf32, #tpu.memory_space<vmem>>, %arg13: memref<1x8x256xf32, #tpu.memory_space<vmem>>, %arg14: memref<8x32xf32, #tpu.memory_space<vmem>>) attributes {dimension_semantics = [#tpu.dimension_semantics<parallel>, #tpu.dimension_semantics<arbitrary>], iteration_bounds = array<i64: 2, 2>, scalar_prefetch = 0 : i64, scratch_operands = 1 : i64, tpu.core_type = #tpu.core_type<tc>, window_params = [{transform_indices = @transform_0, window_bounds = array<i64: 1, 8, 32>}, {transform_indices = @transform_1, window_bounds = array<i64: 1, 12, 32, 8>}, {transform_indices = @transform_2, window_bounds = array<i64: 1, 12, 1, 8>}, {transform_indices = @transform_3, window_bounds = array<i64: 1, 4, 8, 32>}, {transform_indices = @transform_4, window_bounds = array<i64: 1, 32, 128>}, {transform_indices = @transform_5, window_bounds = array<i64: 1, 1, 128>}, {transform_indices = @transform_6, window_bounds = array<i64: 1, 128, 32>}, {transform_indices = @transform_7, window_bounds = array<i64: 1, 6, 32>}, {pipeline_mode = #tpu.pipeline_mode<synchronous>, transform_indices = @transform_8, window_bounds = array<i64: 32, 256>}, {pipeline_mode = #tpu.pipeline_mode<synchronous>, transform_indices = @transform_9, window_bounds = array<i64: 2, 32>}, {pipeline_mode = #tpu.pipeline_mode<synchronous>, transform_indices = @transform_10, window_bounds = array<i64: 1, 256>}, {transform_indices = @transform_11, window_bounds = array<i64: 1, 8, 256>}]} {
    %c0_i32 = arith.constant 0 : i32
    %0 = arith.cmpi eq, %arg1, %c0_i32 : i32
    %1 = arith.extui %0 : i1 to i32
    %c0_i32_0 = arith.constant 0 : i32
    %2 = arith.cmpi ne, %1, %c0_i32_0 : i32
    scf.if %2 {
      %c0_80 = arith.constant 0 : index
      %c0_81 = arith.constant 0 : index
      %c0_82 = arith.constant 0 : index
      %148 = vector.load %arg2[%c0_80, %c0_81, %c0_82] : memref<1x8x32xf32, #tpu.memory_space<vmem>>, vector<1x8x32xf32>
      %149 = vector.shape_cast %148 : vector<1x8x32xf32> to vector<8x32xf32>
      %c0_83 = arith.constant 0 : index
      %c0_84 = arith.constant 0 : index
      %150 = vector.load %arg14[%c0_83, %c0_84] : memref<8x32xf32, #tpu.memory_space<vmem>>, vector<8x32xf32>
      tpu.vector_store %arg14[%c0_83, %c0_84], %149 {strides = array<i32>} : memref<8x32xf32, #tpu.memory_space<vmem>>, vector<8x32xf32>,
    } else {
    }
    %c0 = arith.constant 0 : index
    %c0_1 = arith.constant 0 : index
    %3 = vector.load %arg14[%c0, %c0_1] : memref<8x32xf32, #tpu.memory_space<vmem>>, vector<8x32xf32>
    %c0_2 = arith.constant 0 : index
    %c0_3 = arith.constant 0 : index
    %c0_4 = arith.constant 0 : index
    %4 = vector.load %arg9[%c0_2, %c0_3, %c0_4] : memref<1x6x32xf32, #tpu.memory_space<vmem>>, vector<1x1x32xf32>
    %5 = vector.shape_cast %4 : vector<1x1x32xf32> to vector<1x32xf32>
    %c0_5 = arith.constant 0 : index
    %c1 = arith.constant 1 : index
    %c0_6 = arith.constant 0 : index
    %6 = vector.load %arg9[%c0_5, %c1, %c0_6] : memref<1x6x32xf32, #tpu.memory_space<vmem>>, vector<1x1x32xf32>
    %7 = vector.shape_cast %6 : vector<1x1x32xf32> to vector<1x32xf32>
    %c0_7 = arith.constant 0 : index
    %c2 = arith.constant 2 : index
    %c0_8 = arith.constant 0 : index
    %8 = vector.load %arg9[%c0_7, %c2, %c0_8] : memref<1x6x32xf32, #tpu.memory_space<vmem>>, vector<1x1x32xf32>
    %9 = vector.shape_cast %8 : vector<1x1x32xf32> to vector<1x32xf32>
    %c0_9 = arith.constant 0 : index
    %c3 = arith.constant 3 : index
    %c0_10 = arith.constant 0 : index
    %10 = vector.load %arg9[%c0_9, %c3, %c0_10] : memref<1x6x32xf32, #tpu.memory_space<vmem>>, vector<1x1x32xf32>
    %11 = vector.shape_cast %10 : vector<1x1x32xf32> to vector<1x32xf32>
    %c0_11 = arith.constant 0 : index
    %c4 = arith.constant 4 : index
    %c0_12 = arith.constant 0 : index
    %12 = vector.load %arg9[%c0_11, %c4, %c0_12] : memref<1x6x32xf32, #tpu.memory_space<vmem>>, vector<1x1x32xf32>
    %13 = vector.shape_cast %12 : vector<1x1x32xf32> to vector<1x32xf32>
    %c0_13 = arith.constant 0 : index
    %c5 = arith.constant 5 : index
    %c0_14 = arith.constant 0 : index
    %14 = vector.load %arg9[%c0_13, %c5, %c0_14] : memref<1x6x32xf32, #tpu.memory_space<vmem>>, vector<1x1x32xf32>
    %15 = vector.shape_cast %14 : vector<1x1x32xf32> to vector<1x32xf32>
    %cst = arith.constant dense<0.000000e+00> : vector<8xf32>
    %16 = vector.multi_reduction <add>, %3, %cst [1] : vector<8x32xf32> to vector<8xf32>
    %17 = vector.shape_cast %16 : vector<8xf32> to vector<8x1xf32>
    %cst_15 = arith.constant 3.200000e+01 : f32
    %18 = vector.broadcast %cst_15 : f32 to vector<8x1xf32>
    %19 = arith.divf %17, %18 : vector<8x1xf32>
    %20 = vector.broadcast %19 : vector<8x1xf32> to vector<8x32xf32>
    %21 = arith.subf %3, %20 : vector<8x32xf32>
    %22 = arith.mulf %21, %21 : vector<8x32xf32>
    %cst_16 = arith.constant dense<0.000000e+00> : vector<8xf32>
    %23 = vector.multi_reduction <add>, %22, %cst_16 [1] : vector<8x32xf32> to vector<8xf32>
    %24 = vector.shape_cast %23 : vector<8xf32> to vector<8x1xf32>
    %cst_17 = arith.constant 3.200000e+01 : f32
    %25 = vector.broadcast %cst_17 : f32 to vector<8x1xf32>
    %26 = arith.divf %24, %25 : vector<8x1xf32>
    %27 = vector.broadcast %19 : vector<8x1xf32> to vector<8x32xf32>
    %28 = arith.subf %3, %27 : vector<8x32xf32>
    %cst_18 = arith.constant 9.99999974E-6 : f32
    %29 = vector.broadcast %cst_18 : f32 to vector<8x1xf32>
    %30 = arith.addf %26, %29 : vector<8x1xf32>
    %31 = math.rsqrt %30 : vector<8x1xf32>
    %32 = vector.broadcast %31 : vector<8x1xf32> to vector<8x32xf32>
    %33 = arith.mulf %28, %32 : vector<8x32xf32>
    %34 = vector.broadcast %5 : vector<1x32xf32> to vector<8x32xf32>
    %35 = arith.mulf %33, %34 : vector<8x32xf32>
    %36 = vector.broadcast %7 : vector<1x32xf32> to vector<8x32xf32>
    %37 = arith.addf %35, %36 : vector<8x32xf32>
    %38 = arith.truncf %37 : vector<8x32xf32> to vector<8x32xbf16>
    %39 = vector.shape_cast %38 : vector<8x32xbf16> to vector<1x8x32xbf16>
    %40 = vector.broadcast %39 : vector<1x8x32xbf16> to vector<4x8x32xbf16>
    %c0_19 = arith.constant 0 : index
    %c0_20 = arith.constant 0 : index
    %c0_21 = arith.constant 0 : index
    %c0_22 = arith.constant 0 : index
    %41 = vector.load %arg3[%c0_19, %c0_20, %c0_21, %c0_22] : memref<1x12x32x8xbf16, #tpu.memory_space<vmem>>, vector<1x4x32x8xbf16>
    %42 = vector.shape_cast %41 : vector<1x4x32x8xbf16> to vector<4x32x8xbf16>
    "tpu.trace_start"() <{level = 10 : i32, message = "htc,hcd->htd"}> : () -> ()
    %cst_23 = arith.constant dense<0.000000e+00> : vector<4x8x8xf32>
    %43 = tpu.matmul %40, %42, %cst_23 {dimension_numbers = #tpu.dot_dimension_numbers<[2], [1], [1], [2], [0, 0, 0, 1, 1, 2], [0], [0]>} : vector<4x8x32xbf16>, vector<4x32x8xbf16>, vector<4x8x8xf32> -> vector<4x8x8xf32>
    "tpu.trace_stop"() : () -> ()
    %c0_24 = arith.constant 0 : index
    %c0_25 = arith.constant 0 : index
    %c0_26 = arith.constant 0 : index
    %c0_27 = arith.constant 0 : index
    %44 = vector.load %arg4[%c0_24, %c0_25, %c0_26, %c0_27] : memref<1x12x1x8xf32, #tpu.memory_space<vmem>>, vector<1x4x1x8xf32>
    %45 = vector.shape_cast %44 : vector<1x4x1x8xf32> to vector<4x1x8xf32>
    %46 = vector.broadcast %45 : vector<4x1x8xf32> to vector<4x8x8xf32>
    %47 = arith.addf %43, %46 : vector<4x8x8xf32>
    %c0_28 = arith.constant 0 : index
    %c4_29 = arith.constant 4 : index
    %c0_30 = arith.constant 0 : index
    %c0_31 = arith.constant 0 : index
    %48 = vector.load %arg3[%c0_28, %c4_29, %c0_30, %c0_31] : memref<1x12x32x8xbf16, #tpu.memory_space<vmem>>, vector<1x4x32x8xbf16>
    %49 = vector.shape_cast %48 : vector<1x4x32x8xbf16> to vector<4x32x8xbf16>
    "tpu.trace_start"() <{level = 10 : i32, message = "htc,hcd->htd"}> : () -> ()
    %cst_32 = arith.constant dense<0.000000e+00> : vector<4x8x8xf32>
    %50 = tpu.matmul %40, %49, %cst_32 {dimension_numbers = #tpu.dot_dimension_numbers<[2], [1], [1], [2], [0, 0, 0, 1, 1, 2], [0], [0]>} : vector<4x8x32xbf16>, vector<4x32x8xbf16>, vector<4x8x8xf32> -> vector<4x8x8xf32>
    "tpu.trace_stop"() : () -> ()
    %c0_33 = arith.constant 0 : index
    %c4_34 = arith.constant 4 : index
    %c0_35 = arith.constant 0 : index
    %c0_36 = arith.constant 0 : index
    %51 = vector.load %arg4[%c0_33, %c4_34, %c0_35, %c0_36] : memref<1x12x1x8xf32, #tpu.memory_space<vmem>>, vector<1x4x1x8xf32>
    %52 = vector.shape_cast %51 : vector<1x4x1x8xf32> to vector<4x1x8xf32>
    %53 = vector.broadcast %52 : vector<4x1x8xf32> to vector<4x8x8xf32>
    %54 = arith.addf %50, %53 : vector<4x8x8xf32>
    %c0_37 = arith.constant 0 : index
    %c8 = arith.constant 8 : index
    %c0_38 = arith.constant 0 : index
    %c0_39 = arith.constant 0 : index
    %55 = vector.load %arg3[%c0_37, %c8, %c0_38, %c0_39] : memref<1x12x32x8xbf16, #tpu.memory_space<vmem>>, vector<1x4x32x8xbf16>
    %56 = vector.shape_cast %55 : vector<1x4x32x8xbf16> to vector<4x32x8xbf16>
    "tpu.trace_start"() <{level = 10 : i32, message = "htc,hcd->htd"}> : () -> ()
    %cst_40 = arith.constant dense<0.000000e+00> : vector<4x8x8xf32>
    %57 = tpu.matmul %40, %56, %cst_40 {dimension_numbers = #tpu.dot_dimension_numbers<[2], [1], [1], [2], [0, 0, 0, 1, 1, 2], [0], [0]>} : vector<4x8x32xbf16>, vector<4x32x8xbf16>, vector<4x8x8xf32> -> vector<4x8x8xf32>
    "tpu.trace_stop"() : () -> ()
    %c0_41 = arith.constant 0 : index
    %c8_42 = arith.constant 8 : index
    %c0_43 = arith.constant 0 : index
    %c0_44 = arith.constant 0 : index
    %58 = vector.load %arg4[%c0_41, %c8_42, %c0_43, %c0_44] : memref<1x12x1x8xf32, #tpu.memory_space<vmem>>, vector<1x4x1x8xf32>
    %59 = vector.shape_cast %58 : vector<1x4x1x8xf32> to vector<4x1x8xf32>
    %60 = vector.broadcast %59 : vector<4x1x8xf32> to vector<4x8x8xf32>
    %61 = arith.addf %57, %60 : vector<4x8x8xf32>
    %62 = arith.truncf %47 : vector<4x8x8xf32> to vector<4x8x8xbf16>
    %63 = arith.truncf %54 : vector<4x8x8xf32> to vector<4x8x8xbf16>
    "tpu.trace_start"() <{level = 10 : i32, message = "hqd,hkd->hqk"}> : () -> ()
    %cst_45 = arith.constant dense<0.000000e+00> : vector<4x8x8xf32>
    %64 = tpu.matmul %62, %63, %cst_45 {dimension_numbers = #tpu.dot_dimension_numbers<[2], [2], [1], [1], [0, 0, 0, 1, 1, 1], [0], [0]>} : vector<4x8x8xbf16>, vector<4x8x8xbf16>, vector<4x8x8xf32> -> vector<4x8x8xf32>
    "tpu.trace_stop"() : () -> ()
    %cst_46 = arith.constant 0.353553385 : f32
    %65 = vector.broadcast %cst_46 : f32 to vector<4x8x8xf32>
    %66 = arith.mulf %64, %65 : vector<4x8x8xf32>
    %67 = tpu.iota {dimensions = array<i32: 0>} : vector<8x8xi32>
    %68 = tpu.iota {dimensions = array<i32: 1>} : vector<8x8xi32>
    %69 = arith.cmpi sle, %68, %67 : vector<8x8xi32>
    %cst_47 = arith.constant -1.000000e+30 : f32
    %70 = vector.shape_cast %69 : vector<8x8xi1> to vector<1x8x8xi1>
    %71 = vector.broadcast %70 : vector<1x8x8xi1> to vector<4x8x8xi1>
    %72 = vector.broadcast %cst_47 : f32 to vector<4x8x8xf32>
    %73 = arith.select %71, %66, %72 : vector<4x8x8xi1>, vector<4x8x8xf32>
    %cst_48 = arith.constant dense<0xFF800000> : vector<4x8xf32>
    %74 = vector.multi_reduction <maximumf>, %73, %cst_48 [2] : vector<4x8x8xf32> to vector<4x8xf32>
    %75 = vector.shape_cast %74 : vector<4x8xf32> to vector<4x8x1xf32>
    %76 = vector.broadcast %75 : vector<4x8x1xf32> to vector<4x8x8xf32>
    %77 = arith.subf %73, %76 : vector<4x8x8xf32>
    %78 = math.exp %77 : vector<4x8x8xf32>
    %cst_49 = arith.constant dense<0.000000e+00> : vector<4x8xf32>
    %79 = vector.multi_reduction <add>, %78, %cst_49 [2] : vector<4x8x8xf32> to vector<4x8xf32>
    %80 = vector.shape_cast %79 : vector<4x8xf32> to vector<4x8x1xf32>
    %81 = vector.broadcast %80 : vector<4x8x1xf32> to vector<4x8x8xf32>
    %82 = arith.divf %78, %81 : vector<4x8x8xf32>
    %83 = arith.truncf %82 : vector<4x8x8xf32> to vector<4x8x8xbf16>
    %84 = arith.truncf %61 : vector<4x8x8xf32> to vector<4x8x8xbf16>
    "tpu.trace_start"() <{level = 10 : i32, message = "hqk,hkd->hqd"}> : () -> ()
    %cst_50 = arith.constant dense<0.000000e+00> : vector<4x8x8xf32>
    %85 = tpu.matmul %83, %84, %cst_50 {dimension_numbers = #tpu.dot_dimension_numbers<[2], [1], [1], [2], [0, 0, 0, 1, 1, 2], [0], [0]>} : vector<4x8x8xbf16>, vector<4x8x8xbf16>, vector<4x8x8xf32> -> vector<4x8x8xf32>
    "tpu.trace_stop"() : () -> ()
    %86 = arith.truncf %85 : vector<4x8x8xf32> to vector<4x8x8xbf16>
    %c0_51 = arith.constant 0 : index
    %c0_52 = arith.constant 0 : index
    %c0_53 = arith.constant 0 : index
    %c0_54 = arith.constant 0 : index
    %87 = vector.load %arg5[%c0_51, %c0_52, %c0_53, %c0_54] : memref<1x4x8x32xbf16, #tpu.memory_space<vmem>>, vector<1x4x8x32xbf16>
    %88 = vector.shape_cast %87 : vector<1x4x8x32xbf16> to vector<4x8x32xbf16>
    "tpu.trace_start"() <{level = 10 : i32, message = "htd,hdc->htc"}> : () -> ()
    %cst_55 = arith.constant dense<0.000000e+00> : vector<4x8x32xf32>
    %89 = tpu.matmul %86, %88, %cst_55 {dimension_numbers = #tpu.dot_dimension_numbers<[2], [1], [1], [2], [0, 0, 0, 1, 1, 2], [0], [0]>} : vector<4x8x8xbf16>, vector<4x8x32xbf16>, vector<4x8x32xf32> -> vector<4x8x32xf32>
    "tpu.trace_stop"() : () -> ()
    %cst_56 = arith.constant dense<0.000000e+00> : vector<8x32xf32>
    %90 = vector.multi_reduction <add>, %89, %cst_56 [0] : vector<4x8x32xf32> to vector<8x32xf32>
    %91 = arith.addf %3, %90 : vector<8x32xf32>
    %92 = vector.broadcast %9 : vector<1x32xf32> to vector<8x32xf32>
    %93 = arith.addf %91, %92 : vector<8x32xf32>
    %cst_57 = arith.constant dense<0.000000e+00> : vector<8xf32>
    %94 = vector.multi_reduction <add>, %93, %cst_57 [1] : vector<8x32xf32> to vector<8xf32>
    %95 = vector.shape_cast %94 : vector<8xf32> to vector<8x1xf32>
    %cst_58 = arith.constant 3.200000e+01 : f32
    %96 = vector.broadcast %cst_58 : f32 to vector<8x1xf32>
    %97 = arith.divf %95, %96 : vector<8x1xf32>
    %98 = vector.broadcast %97 : vector<8x1xf32> to vector<8x32xf32>
    %99 = arith.subf %93, %98 : vector<8x32xf32>
    %100 = arith.mulf %99, %99 : vector<8x32xf32>
    %cst_59 = arith.constant dense<0.000000e+00> : vector<8xf32>
    %101 = vector.multi_reduction <add>, %100, %cst_59 [1] : vector<8x32xf32> to vector<8xf32>
    %102 = vector.shape_cast %101 : vector<8xf32> to vector<8x1xf32>
    %cst_60 = arith.constant 3.200000e+01 : f32
    %103 = vector.broadcast %cst_60 : f32 to vector<8x1xf32>
    %104 = arith.divf %102, %103 : vector<8x1xf32>
    %105 = vector.broadcast %97 : vector<8x1xf32> to vector<8x32xf32>
    %106 = arith.subf %93, %105 : vector<8x32xf32>
    %cst_61 = arith.constant 9.99999974E-6 : f32
    %107 = vector.broadcast %cst_61 : f32 to vector<8x1xf32>
    %108 = arith.addf %104, %107 : vector<8x1xf32>
    %109 = math.rsqrt %108 : vector<8x1xf32>
    %110 = vector.broadcast %109 : vector<8x1xf32> to vector<8x32xf32>
    %111 = arith.mulf %106, %110 : vector<8x32xf32>
    %112 = vector.broadcast %11 : vector<1x32xf32> to vector<8x32xf32>
    %113 = arith.mulf %111, %112 : vector<8x32xf32>
    %114 = vector.broadcast %13 : vector<1x32xf32> to vector<8x32xf32>
    %115 = arith.addf %113, %114 : vector<8x32xf32>
    %116 = arith.truncf %115 : vector<8x32xf32> to vector<8x32xbf16>
    %c0_62 = arith.constant 0 : index
    %c0_63 = arith.constant 0 : index
    %c0_64 = arith.constant 0 : index
    %117 = vector.load %arg6[%c0_62, %c0_63, %c0_64] : memref<1x32x128xbf16, #tpu.memory_space<vmem>>, vector<1x32x128xbf16>
    %118 = vector.shape_cast %117 : vector<1x32x128xbf16> to vector<32x128xbf16>
    %cst_65 = arith.constant dense<0.000000e+00> : vector<8x128xf32>
    %119 = tpu.matmul %116, %118, %cst_65 {dimension_numbers = #tpu.dot_dimension_numbers<[1], [0], [0], [1], [0, 0, 1, 1], [], []>} : vector<8x32xbf16>, vector<32x128xbf16>, vector<8x128xf32> -> vector<8x128xf32>
    %c0_66 = arith.constant 0 : index
    %c0_67 = arith.constant 0 : index
    %c0_68 = arith.constant 0 : index
    %120 = vector.load %arg7[%c0_66, %c0_67, %c0_68] : memref<1x1x128xf32, #tpu.memory_space<vmem>>, vector<1x1x128xf32>
    %121 = vector.shape_cast %120 : vector<1x1x128xf32> to vector<1x128xf32>
    %122 = vector.broadcast %121 : vector<1x128xf32> to vector<8x128xf32>
    %123 = arith.addf %119, %122 : vector<8x128xf32>
    %cst_69 = arith.constant 5.000000e-01 : f32
    %124 = vector.broadcast %cst_69 : f32 to vector<8x128xf32>
    %125 = arith.mulf %124, %123 : vector<8x128xf32>
    %cst_70 = arith.constant 4.471500e-02 : f32
    %126 = vector.broadcast %cst_70 : f32 to vector<8x128xf32>
    %127 = arith.mulf %126, %123 : vector<8x128xf32>
    %128 = arith.mulf %127, %123 : vector<8x128xf32>
    %129 = arith.mulf %128, %123 : vector<8x128xf32>
    %130 = arith.addf %123, %129 : vector<8x128xf32>
    %cst_71 = arith.constant 0.797884583 : f32
    %131 = vector.broadcast %cst_71 : f32 to vector<8x128xf32>
    %132 = arith.mulf %131, %130 : vector<8x128xf32>
    %133 = math.tanh %132 : vector<8x128xf32>
    %cst_72 = arith.constant 1.000000e+00 : f32
    %134 = vector.broadcast %cst_72 : f32 to vector<8x128xf32>
    %135 = arith.addf %134, %133 : vector<8x128xf32>
    %136 = arith.mulf %125, %135 : vector<8x128xf32>
    %137 = arith.truncf %136 : vector<8x128xf32> to vector<8x128xbf16>
    %c0_73 = arith.constant 0 : index
    %c0_74 = arith.constant 0 : index
    %c0_75 = arith.constant 0 : index
    %138 = vector.load %arg8[%c0_73, %c0_74, %c0_75] : memref<1x128x32xbf16, #tpu.memory_space<vmem>>, vector<1x128x32xbf16>
    %139 = vector.shape_cast %138 : vector<1x128x32xbf16> to vector<128x32xbf16>
    %cst_76 = arith.constant dense<0.000000e+00> : vector<8x32xf32>
    %140 = tpu.matmul %137, %139, %cst_76 {dimension_numbers = #tpu.dot_dimension_numbers<[1], [0], [0], [1], [0, 0, 1, 1], [], []>} : vector<8x128xbf16>, vector<128x32xbf16>, vector<8x32xf32> -> vector<8x32xf32>
    %141 = arith.addf %93, %140 : vector<8x32xf32>
    %142 = vector.broadcast %15 : vector<1x32xf32> to vector<8x32xf32>
    %143 = arith.addf %141, %142 : vector<8x32xf32>
    %c0_77 = arith.constant 0 : index
    %c0_78 = arith.constant 0 : index
    %144 = vector.load %arg14[%c0_77, %c0_78] : memref<8x32xf32, #tpu.memory_space<vmem>>, vector<8x32xf32>
    tpu.vector_store %arg14[%c0_77, %c0_78], %143 {strides = array<i32>} : memref<8x32xf32, #tpu.memory_space<vmem>>, vector<8x32xf32>,
    %c1_i32 = arith.constant 1 : i32
    %145 = arith.cmpi eq, %arg1, %c1_i32 : i32
    %146 = arith.extui %145 : i1 to i32
    %c0_i32_79 = arith.constant 0 : i32
    %147 = arith.cmpi ne, %146, %c0_i32_79 : i32
    scf.if %147 {
      %c0_80 = arith.constant 0 : index
      %c0_81 = arith.constant 0 : index
      %148 = vector.load %arg11[%c0_80, %c0_81] : memref<2x32xf32, #tpu.memory_space<vmem>>, vector<1x32xf32>
      %c1_82 = arith.constant 1 : index
      %c0_83 = arith.constant 0 : index
      %149 = vector.load %arg11[%c1_82, %c0_83] : memref<2x32xf32, #tpu.memory_space<vmem>>, vector<1x32xf32>
      %cst_84 = arith.constant dense<0.000000e+00> : vector<8xf32>
      %150 = vector.multi_reduction <add>, %143, %cst_84 [1] : vector<8x32xf32> to vector<8xf32>
      %151 = vector.shape_cast %150 : vector<8xf32> to vector<8x1xf32>
      %cst_85 = arith.constant 3.200000e+01 : f32
      %152 = vector.broadcast %cst_85 : f32 to vector<8x1xf32>
      %153 = arith.divf %151, %152 : vector<8x1xf32>
      %154 = vector.broadcast %153 : vector<8x1xf32> to vector<8x32xf32>
      %155 = arith.subf %143, %154 : vector<8x32xf32>
      %156 = arith.mulf %155, %155 : vector<8x32xf32>
      %cst_86 = arith.constant dense<0.000000e+00> : vector<8xf32>
      %157 = vector.multi_reduction <add>, %156, %cst_86 [1] : vector<8x32xf32> to vector<8xf32>
      %158 = vector.shape_cast %157 : vector<8xf32> to vector<8x1xf32>
      %cst_87 = arith.constant 3.200000e+01 : f32
      %159 = vector.broadcast %cst_87 : f32 to vector<8x1xf32>
      %160 = arith.divf %158, %159 : vector<8x1xf32>
      %161 = vector.broadcast %153 : vector<8x1xf32> to vector<8x32xf32>
      %162 = arith.subf %143, %161 : vector<8x32xf32>
      %cst_88 = arith.constant 9.99999974E-6 : f32
      %163 = vector.broadcast %cst_88 : f32 to vector<8x1xf32>
      %164 = arith.addf %160, %163 : vector<8x1xf32>
      %165 = math.rsqrt %164 : vector<8x1xf32>
      %166 = vector.broadcast %165 : vector<8x1xf32> to vector<8x32xf32>
      %167 = arith.mulf %162, %166 : vector<8x32xf32>
      %168 = vector.broadcast %148 : vector<1x32xf32> to vector<8x32xf32>
      %169 = arith.mulf %167, %168 : vector<8x32xf32>
      %170 = vector.broadcast %149 : vector<1x32xf32> to vector<8x32xf32>
      %171 = arith.addf %169, %170 : vector<8x32xf32>
      %172 = arith.truncf %171 : vector<8x32xf32> to vector<8x32xbf16>
      %c0_89 = arith.constant 0 : index
      %c0_90 = arith.constant 0 : index
      %173 = vector.load %arg10[%c0_89, %c0_90] : memref<32x256xbf16, #tpu.memory_space<vmem>>, vector<32x256xbf16>
      %cst_91 = arith.constant dense<0.000000e+00> : vector<8x256xf32>
      %174 = tpu.matmul %172, %173, %cst_91 {dimension_numbers = #tpu.dot_dimension_numbers<[1], [0], [0], [1], [0, 0, 1, 1], [], []>} : vector<8x32xbf16>, vector<32x256xbf16>, vector<8x256xf32> -> vector<8x256xf32>
      %c0_92 = arith.constant 0 : index
      %c0_93 = arith.constant 0 : index
      %175 = vector.load %arg12[%c0_92, %c0_93] : memref<1x256xf32, #tpu.memory_space<vmem>>, vector<1x256xf32>
      %176 = vector.broadcast %175 : vector<1x256xf32> to vector<8x256xf32>
      %177 = arith.addf %174, %176 : vector<8x256xf32>
      %c0_94 = arith.constant 0 : index
      %c0_95 = arith.constant 0 : index
      %c0_96 = arith.constant 0 : index
      %178 = vector.load %arg13[%c0_94, %c0_95, %c0_96] : memref<1x8x256xf32, #tpu.memory_space<vmem>>, vector<1x8x256xf32>
      %179 = vector.shape_cast %178 : vector<1x8x256xf32> to vector<8x256xf32>
      %180 = vector.shape_cast %177 : vector<8x256xf32> to vector<1x8x256xf32>
      tpu.vector_store %arg13[%c0_94, %c0_95, %c0_96], %180 {strides = array<i32>} : memref<1x8x256xf32, #tpu.memory_space<vmem>>, vector<1x8x256xf32>,
    } else {
    }
    return
  }
  func.func @transform_0(%arg0: i32, %arg1: i32) -> (i32, i32, i32) {
    %c0_i32 = arith.constant 0 : i32
    %c0_i32_0 = arith.constant 0 : i32
    %c0_i32_1 = arith.constant 0 : i32
    return %arg0, %c0_i32, %c0_i32_0 : i32, i32, i32
  }
  func.func @transform_1(%arg0: i32, %arg1: i32) -> (i32, i32, i32, i32) {
    %c0_i32 = arith.constant 0 : i32
    %c0_i32_0 = arith.constant 0 : i32
    %c0_i32_1 = arith.constant 0 : i32
    %c0_i32_2 = arith.constant 0 : i32
    return %arg1, %c0_i32, %c0_i32_0, %c0_i32_1 : i32, i32, i32, i32
  }
  func.func @transform_2(%arg0: i32, %arg1: i32) -> (i32, i32, i32, i32) {
    %c0_i32 = arith.constant 0 : i32
    %c0_i32_0 = arith.constant 0 : i32
    %c0_i32_1 = arith.constant 0 : i32
    %c0_i32_2 = arith.constant 0 : i32
    return %arg1, %c0_i32, %c0_i32_0, %c0_i32_1 : i32, i32, i32, i32
  }
  func.func @transform_3(%arg0: i32, %arg1: i32) -> (i32, i32, i32, i32) {
    %c0_i32 = arith.constant 0 : i32
    %c0_i32_0 = arith.constant 0 : i32
    %c0_i32_1 = arith.constant 0 : i32
    %c0_i32_2 = arith.constant 0 : i32
    return %arg1, %c0_i32, %c0_i32_0, %c0_i32_1 : i32, i32, i32, i32
  }
  func.func @transform_4(%arg0: i32, %arg1: i32) -> (i32, i32, i32) {
    %c0_i32 = arith.constant 0 : i32
    %c0_i32_0 = arith.constant 0 : i32
    %c0_i32_1 = arith.constant 0 : i32
    return %arg1, %c0_i32, %c0_i32_0 : i32, i32, i32
  }
  func.func @transform_5(%arg0: i32, %arg1: i32) -> (i32, i32, i32) {
    %c0_i32 = arith.constant 0 : i32
    %c0_i32_0 = arith.constant 0 : i32
    %c0_i32_1 = arith.constant 0 : i32
    return %arg1, %c0_i32, %c0_i32_0 : i32, i32, i32
  }
  func.func @transform_6(%arg0: i32, %arg1: i32) -> (i32, i32, i32) {
    %c0_i32 = arith.constant 0 : i32
    %c0_i32_0 = arith.constant 0 : i32
    %c0_i32_1 = arith.constant 0 : i32
    return %arg1, %c0_i32, %c0_i32_0 : i32, i32, i32
  }
  func.func @transform_7(%arg0: i32, %arg1: i32) -> (i32, i32, i32) {
    %c0_i32 = arith.constant 0 : i32
    %c0_i32_0 = arith.constant 0 : i32
    %c0_i32_1 = arith.constant 0 : i32
    return %arg1, %c0_i32, %c0_i32_0 : i32, i32, i32
  }
  func.func @transform_8(%arg0: i32, %arg1: i32) -> (i32, i32) {
    %c0_i32 = arith.constant 0 : i32
    %c0_i32_0 = arith.constant 0 : i32
    %c0_i32_1 = arith.constant 0 : i32
    return %c0_i32, %c0_i32_0 : i32, i32
  }
  func.func @transform_9(%arg0: i32, %arg1: i32) -> (i32, i32) {
    %c0_i32 = arith.constant 0 : i32
    %c0_i32_0 = arith.constant 0 : i32
    %c0_i32_1 = arith.constant 0 : i32
    return %c0_i32, %c0_i32_0 : i32, i32
  }
  func.func @transform_10(%arg0: i32, %arg1: i32) -> (i32, i32) {
    %c0_i32 = arith.constant 0 : i32
    %c0_i32_0 = arith.constant 0 : i32
    %c0_i32_1 = arith.constant 0 : i32
    return %c0_i32, %c0_i32_0 : i32, i32
  }
  func.func @transform_11(%arg0: i32, %arg1: i32) -> (i32, i32, i32) {
    %c0_i32 = arith.constant 0 : i32
    %c0_i32_0 = arith.constant 0 : i32
    %c0_i32_1 = arith.constant 0 : i32
    return %arg0, %c0_i32, %c0_i32_0 : i32, i32, i32
  }
}

</mosaic_0001>

<llo_original>
// kernel: tpu_custom_call.1
$region0: #{tpu_custom_call.1}
  #allocation0 [shape = 'u32[]', space=smem, size = 0x4, offset = 0x4, fixed_abs, tag = 'smem constant byte address 0x4 - core index']
  #allocation1 [shape = 'u32[144,128]{1,0:T(1,128)}', space=vmem, size = 0x12000, scoped, tag = 'internal scratch']
  #allocation2 [shape = 'f32[8,32]{1,0:T(8,128)}', space=vmem, size = 0x1000, scoped, tag = 'scratch operand']
  %s0 = inlined_call_operand.vmem [shape: f32[2,8,32], index: 0, kind: input, shape index: {}]
  %s1 = inlined_call_operand.vmem [shape: bf16[2,12,32,8], index: 1, kind: input, shape index: {}]
  %s2 = inlined_call_operand.vmem [shape: f32[2,12,1,8], index: 2, kind: input, shape index: {}]
  %s3 = inlined_call_operand.vmem [shape: bf16[2,4,8,32], index: 3, kind: input, shape index: {}]
  %s4 = inlined_call_operand.vmem [shape: bf16[2,32,128], index: 4, kind: input, shape index: {}]
  %s5 = inlined_call_operand.vmem [shape: f32[2,1,128], index: 5, kind: input, shape index: {}]
  %s6 = inlined_call_operand.vmem [shape: bf16[2,128,32], index: 6, kind: input, shape index: {}]
  %s7 = inlined_call_operand.vmem [shape: f32[2,6,32], index: 7, kind: input, shape index: {}]
  %s8 = inlined_call_operand.vmem [shape: bf16[32,256], index: 8, kind: input, shape index: {}]
  %s9 = inlined_call_operand.vmem [shape: f32[2,32], index: 9, kind: input, shape index: {}]
  %s10 = inlined_call_operand.vmem [shape: f32[1,256], index: 10, kind: input, shape index: {}]
  %s11 = inlined_call_operand.hbm [shape: f32[2,8,256], index: 11, kind: output, shape index: {}]
  %s12 = sld [smem:[#allocation0]]
  $region85: #{tpu_custom_call.1} parent=0
    _
  %s14 = ssub.s32 1, %s12
  %s15 = scalar_select 0, %s14, %s12
  $region1: #{tpu_custom_call.1} parent=0
    #allocation3 [shape = 'u8[16384]{0}', space=vmem, size = 0x4000, scoped, tag = 'output window, operand 0']
    #allocation4 [shape = 's32[2]{0}', space=sflag, size = 0x8, scoped, tag = 'scoped memory for tpu_custom_call.1']
    %16 = vsyncpa [#allocation4], 0
    %s17 = scalar_lea.sflag [#allocation4], 1
    %18 = vsyncpa %s17, 0
    loop: start=0, step=1, limit=6
    $region2: #{tpu_custom_call.1} parent=1 // loop_pre_header
      _
    $region3: #{tpu_custom_call.1} parent=1 // loop_header
      %s20 = sphi 0, %s24
      %p21 = scmp.ge.s32.totalorder %s20, 6
      %s27 = sphi 0, %s39
      %s28 = sphi 0, %s35
      %s29 = sphi 0, %s27
      %s30 = sphi 0, %s28
      %s31 = sphi 0, %s29
      %s32 = sphi 0, %s30
      %s42 = sphi 0, %s44
      %s45 = sphi 0, %s42
      %s46 = sphi 0, %s45
      %s62 = sphi 0, %s46
      %s68 = sphi 0, %s70
      %s71 = sphi 0, %s68
      %s72 = sphi 0, %s71
      %s88 = sphi 0, %s72
      %s94 = sphi 0, %s96
      %s97 = sphi 0, %s94
      %s98 = sphi 0, %s97
      %s114 = sphi 0, %s98
      %s120 = sphi 0, %s122
      %s123 = sphi 0, %s120
      %s124 = sphi 0, %s123
      %s140 = sphi 0, %s124
      %s146 = sphi 0, %s148
      %s149 = sphi 0, %s146
      %s150 = sphi 0, %s149
      %s166 = sphi 0, %s150
      %s172 = sphi 0, %s174
      %s175 = sphi 0, %s172
      %s176 = sphi 0, %s175
      %s192 = sphi 0, %s176
      %s198 = sphi 0, %s200
      %s201 = sphi 0, %s198
      %s202 = sphi 0, %s201
      %s218 = sphi 0, %s202
      %s224 = sphi 0, %s226
      %s227 = sphi 0, %s224
      %s228 = sphi 0, %s227
      %s244 = sphi 0, %s228
      %s248 = sphi 0, %s248
      %s250 = sphi 0, %s248
      %s251 = sphi 0, %s250
      %s265 = sphi 0, %s251
      %s269 = sphi 0, %s269
      %s271 = sphi 0, %s269
      %s272 = sphi 0, %s271
      %s286 = sphi 0, %s272
      %s290 = sphi 0, %s290
      %s292 = sphi 0, %s290
      %s293 = sphi 0, %s292
      %s307 = sphi 0, %s293
      %s313 = sphi 0, %s315
      %s316 = sphi 0, %s313
      %s317 = sphi 0, %s316
      %s333 = sphi 0, %s317
    $region4: #{tpu_custom_call.1} parent=1 // loop_header_branch
      %23 = sbr.rel (%p21) target = $region8
    $region5: #{tpu_custom_call.1} parent=1 // loop_body
      %s25 = ssub.s32 %s20, 1
      %s26 = ssub.s32 %s20, 2
      %s33 = sadd.s32 1, %s28
      %p34 = scmp.ge.s32.totalorder %s33, 2
      %s35 = scalar_select %p34, 0, %s33
      %s36 = sadd.s32 1, %s27
      %s37 = scalar_select %p34, %s36, %s27
      %p38 = scmp.ge.s32.totalorder %s37, 2
      %s39 = scalar_select %p38, 0, %s37
      %s40 = ssub.s32 %s27, %s39
      %p41 = scmp.eq.s32.totalorder %s40, 0
      %s43 = sadd.s32 %s42, 1
      %s44 = scalar_select %p41, %s42, %s43
      %p47 = pneg %p41
      %p48 = scmp.eq.s32.totalorder %s20, 3
      %p49 = por %p47, %p48
      %p50 = scmp.ne.s32.totalorder %s42, %s45
      %p51 = scmp.eq.s32.totalorder %s20, 0
      %p52 = por %p50, %p51
      %p53 = scmp.ne.s32.totalorder %s42, %s45
      %p54 = scmp.eq.s32.totalorder %s25, 3
      %p55 = por %p53, %p54
      %p56 = scmp.ne.s32.totalorder %s45, %s46
      %p57 = scmp.eq.s32.totalorder %s25, 0
      %p58 = por %p56, %p57
      %p59 = scmp.ne.s32.totalorder %s45, %s46
      %p60 = scmp.eq.s32.totalorder %s26, 3
      %p61 = por %p59, %p60
      %p63 = scmp.ne.s32.totalorder %s46, %s62
      %p64 = scmp.eq.s32.totalorder %s26, 0
      %p65 = por %p63, %p64
      %s66 = ssub.s32 %s28, %s35
      %p67 = scmp.eq.s32.totalorder %s66, 0
      %s69 = sadd.s32 %s68, 1
      %s70 = scalar_select %p67, %s68, %s69
      %p73 = pneg %p67
      %p74 = scmp.eq.s32.totalorder %s20, 3
      %p75 = por %p73, %p74
      %p76 = scmp.ne.s32.totalorder %s68, %s71
      %p77 = scmp.eq.s32.totalorder %s20, 0
      %p78 = por %p76, %p77
      %p79 = scmp.ne.s32.totalorder %s68, %s71
      %p80 = scmp.eq.s32.totalorder %s25, 3
      %p81 = por %p79, %p80
      %p82 = scmp.ne.s32.totalorder %s71, %s72
      %p83 = scmp.eq.s32.totalorder %s25, 0
      %p84 = por %p82, %p83
      %p85 = scmp.ne.s32.totalorder %s71, %s72
      %p86 = scmp.eq.s32.totalorder %s26, 3
      %p87 = por %p85, %p86
      %p89 = scmp.ne.s32.totalorder %s72, %s88
      %p90 = scmp.eq.s32.totalorder %s26, 0
      %p91 = por %p89, %p90
      %s92 = ssub.s32 %s28, %s35
      %p93 = scmp.eq.s32.totalorder %s92, 0
      %s95 = sadd.s32 %s94, 1
      %s96 = scalar_select %p93, %s94, %s95
      %p99 = pneg %p93
      %p100 = scmp.eq.s32.totalorder %s20, 3
      %p101 = por %p99, %p100
      %p102 = scmp.ne.s32.totalorder %s94, %s97
      %p103 = scmp.eq.s32.totalorder %s20, 0
      %p104 = por %p102, %p103
      %p105 = scmp.ne.s32.totalorder %s94, %s97
      %p106 = scmp.eq.s32.totalorder %s25, 3
      %p107 = por %p105, %p106
      %p108 = scmp.ne.s32.totalorder %s97, %s98
      %p109 = scmp.eq.s32.totalorder %s25, 0
      %p110 = por %p108, %p109
      %p111 = scmp.ne.s32.totalorder %s97, %s98
      %p112 = scmp.eq.s32.totalorder %s26, 3
      %p113 = por %p111, %p112
      %p115 = scmp.ne.s32.totalorder %s98, %s114
      %p116 = scmp.eq.s32.totalorder %s26, 0
      %p117 = por %p115, %p116
      %s118 = ssub.s32 %s28, %s35
      %p119 = scmp.eq.s32.totalorder %s118, 0
      %s121 = sadd.s32 %s120, 1
      %s122 = scalar_select %p119, %s120, %s121
      %p125 = pneg %p119
      %p126 = scmp.eq.s32.totalorder %s20, 3
      %p127 = por %p125, %p126
      %p128 = scmp.ne.s32.totalorder %s120, %s123
      %p129 = scmp.eq.s32.totalorder %s20, 0
      %p130 = por %p128, %p129
      %p131 = scmp.ne.s32.totalorder %s120, %s123
      %p132 = scmp.eq.s32.totalorder %s25, 3
      %p133 = por %p131, %p132
      %p134 = scmp.ne.s32.totalorder %s123, %s124
      %p135 = scmp.eq.s32.totalorder %s25, 0
      %p136 = por %p134, %p135
      %p137 = scmp.ne.s32.totalorder %s123, %s124
      %p138 = scmp.eq.s32.totalorder %s26, 3
      %p139 = por %p137, %p138
      %p141 = scmp.ne.s32.totalorder %s124, %s140
      %p142 = scmp.eq.s32.totalorder %s26, 0
      %p143 = por %p141, %p142
      %s144 = ssub.s32 %s28, %s35
      %p145 = scmp.eq.s32.totalorder %s144, 0
      %s147 = sadd.s32 %s146, 1
      %s148 = scalar_select %p145, %s146, %s147
      %p151 = pneg %p145
      %p152 = scmp.eq.s32.totalorder %s20, 3
      %p153 = por %p151, %p152
      %p154 = scmp.ne.s32.totalorder %s146, %s149
      %p155 = scmp.eq.s32.totalorder %s20, 0
      %p156 = por %p154, %p155
      %p157 = scmp.ne.s32.totalorder %s146, %s149
      %p158 = scmp.eq.s32.totalorder %s25, 3
      %p159 = por %p157, %p158
      %p160 = scmp.ne.s32.totalorder %s149, %s150
      %p161 = scmp.eq.s32.totalorder %s25, 0
      %p162 = por %p160, %p161
      %p163 = scmp.ne.s32.totalorder %s149, %s150
      %p164 = scmp.eq.s32.totalorder %s26, 3
      %p165 = por %p163, %p164
      %p167 = scmp.ne.s32.totalorder %s150, %s166
      %p168 = scmp.eq.s32.totalorder %s26, 0
      %p169 = por %p167, %p168
      %s170 = ssub.s32 %s28, %s35
      %p171 = scmp.eq.s32.totalorder %s170, 0
      %s173 = sadd.s32 %s172, 1
      %s174 = scalar_select %p171, %s172, %s173
      %p177 = pneg %p171
      %p178 = scmp.eq.s32.totalorder %s20, 3
      %p179 = por %p177, %p178
      %p180 = scmp.ne.s32.totalorder %s172, %s175
      %p181 = scmp.eq.s32.totalorder %s20, 0
      %p182 = por %p180, %p181
      %p183 = scmp.ne.s32.totalorder %s172, %s175
      %p184 = scmp.eq.s32.totalorder %s25, 3
      %p185 = por %p183, %p184
      %p186 = scmp.ne.s32.totalorder %s175, %s176
      %p187 = scmp.eq.s32.totalorder %s25, 0
      %p188 = por %p186, %p187
      %p189 = scmp.ne.s32.totalorder %s175, %s176
      %p190 = scmp.eq.s32.totalorder %s26, 3
      %p191 = por %p189, %p190
      %p193 = scmp.ne.s32.totalorder %s176, %s192
      %p194 = scmp.eq.s32.totalorder %s26, 0
      %p195 = por %p193, %p194
      %s196 = ssub.s32 %s28, %s35
      %p197 = scmp.eq.s32.totalorder %s196, 0
      %s199 = sadd.s32 %s198, 1
      %s200 = scalar_select %p197, %s198, %s199
      %p203 = pneg %p197
      %p204 = scmp.eq.s32.totalorder %s20, 3
      %p205 = por %p203, %p204
      %p206 = scmp.ne.s32.totalorder %s198, %s201
      %p207 = scmp.eq.s32.totalorder %s20, 0
      %p208 = por %p206, %p207
      %p209 = scmp.ne.s32.totalorder %s198, %s201
      %p210 = scmp.eq.s32.totalorder %s25, 3
      %p211 = por %p209, %p210
      %p212 = scmp.ne.s32.totalorder %s201, %s202
      %p213 = scmp.eq.s32.totalorder %s25, 0
      %p214 = por %p212, %p213
      %p215 = scmp.ne.s32.totalorder %s201, %s202
      %p216 = scmp.eq.s32.totalorder %s26, 3
      %p217 = por %p215, %p216
      %p219 = scmp.ne.s32.totalorder %s202, %s218
      %p220 = scmp.eq.s32.totalorder %s26, 0
      %p221 = por %p219, %p220
      %s222 = ssub.s32 %s28, %s35
      %p223 = scmp.eq.s32.totalorder %s222, 0
      %s225 = sadd.s32 %s224, 1
      %s226 = scalar_select %p223, %s224, %s225
      %p229 = pneg %p223
      %p230 = scmp.eq.s32.totalorder %s20, 3
      %p231 = por %p229, %p230
      %p232 = scmp.ne.s32.totalorder %s224, %s227
      %p233 = scmp.eq.s32.totalorder %s20, 0
      %p234 = por %p232, %p233
      %p235 = scmp.ne.s32.totalorder %s224, %s227
      %p236 = scmp.eq.s32.totalorder %s25, 3
      %p237 = por %p235, %p236
      %p238 = scmp.ne.s32.totalorder %s227, %s228
      %p239 = scmp.eq.s32.totalorder %s25, 0
      %p240 = por %p238, %p239
      %p241 = scmp.ne.s32.totalorder %s227, %s228
      %p242 = scmp.eq.s32.totalorder %s26, 3
      %p243 = por %p241, %p242
      %p245 = scmp.ne.s32.totalorder %s228, %s244
      %p246 = scmp.eq.s32.totalorder %s26, 0
      %p247 = por %p245, %p246
      %s249 = sadd.s32 %s248, 1
      %p252 = scmp.eq.s32.totalorder %s20, 3
      %p253 = scmp.ne.s32.totalorder %s248, %s250
      %p254 = scmp.eq.s32.totalorder %s20, 0
      %p255 = por %p253, %p254
      %p256 = scmp.ne.s32.totalorder %s248, %s250
      %p257 = scmp.eq.s32.totalorder %s25, 3
      %p258 = por %p256, %p257
      %p259 = scmp.ne.s32.totalorder %s250, %s251
      %p260 = scmp.eq.s32.totalorder %s25, 0
      %p261 = por %p259, %p260
      %p262 = scmp.ne.s32.totalorder %s250, %s251
      %p263 = scmp.eq.s32.totalorder %s26, 3
      %p264 = por %p262, %p263
      %p266 = scmp.ne.s32.totalorder %s251, %s265
      %p267 = scmp.eq.s32.totalorder %s26, 0
      %p268 = por %p266, %p267
      %s270 = sadd.s32 %s269, 1
      %p273 = scmp.eq.s32.totalorder %s20, 3
      %p274 = scmp.ne.s32.totalorder %s269, %s271
      %p275 = scmp.eq.s32.totalorder %s20, 0
      %p276 = por %p274, %p275
      %p277 = scmp.ne.s32.totalorder %s269, %s271
      %p278 = scmp.eq.s32.totalorder %s25, 3
      %p279 = por %p277, %p278
      %p280 = scmp.ne.s32.totalorder %s271, %s272
      %p281 = scmp.eq.s32.totalorder %s25, 0
      %p282 = por %p280, %p281
      %p283 = scmp.ne.s32.totalorder %s271, %s272
      %p284 = scmp.eq.s32.totalorder %s26, 3
      %p285 = por %p283, %p284
      %p287 = scmp.ne.s32.totalorder %s272, %s286
      %p288 = scmp.eq.s32.totalorder %s26, 0
      %p289 = por %p287, %p288
      %s291 = sadd.s32 %s290, 1
      %p294 = scmp.eq.s32.totalorder %s20, 3
      %p295 = scmp.ne.s32.totalorder %s290, %s292
      %p296 = scmp.eq.s32.totalorder %s20, 0
      %p297 = por %p295, %p296
      %p298 = scmp.ne.s32.totalorder %s290, %s292
      %p299 = scmp.eq.s32.totalorder %s25, 3
      %p300 = por %p298, %p299
      %p301 = scmp.ne.s32.totalorder %s292, %s293
      %p302 = scmp.eq.s32.totalorder %s25, 0
      %p303 = por %p301, %p302
      %p304 = scmp.ne.s32.totalorder %s292, %s293
      %p305 = scmp.eq.s32.totalorder %s26, 3
      %p306 = por %p304, %p305
      %p308 = scmp.ne.s32.totalorder %s293, %s307
      %p309 = scmp.eq.s32.totalorder %s26, 0
      %p310 = por %p308, %p309
      %s311 = ssub.s32 %s27, %s39
      %p312 = scmp.eq.s32.totalorder %s311, 0
      %s314 = sadd.s32 %s313, 1
      %s315 = scalar_select %p312, %s313, %s314
      %p318 = pneg %p312
      %p319 = scmp.eq.s32.totalorder %s20, 3
      %p320 = por %p318, %p319
      %p321 = scmp.ne.s32.totalorder %s313, %s316
      %p322 = scmp.eq.s32.totalorder %s20, 0
      %p323 = por %p321, %p322
      %p324 = scmp.ne.s32.totalorder %s313, %s316
      %p325 = scmp.eq.s32.totalorder %s25, 3
      %p326 = por %p324, %p325
      %p327 = scmp.ne.s32.totalorder %s316, %s317
      %p328 = scmp.eq.s32.totalorder %s25, 0
      %p329 = por %p327, %p328
      %p330 = scmp.ne.s32.totalorder %s316, %s317
      %p331 = scmp.eq.s32.totalorder %s26, 3
      %p332 = por %p330, %p331
      %p334 = scmp.ne.s32.totalorder %s317, %s333
      %p335 = scmp.eq.s32.totalorder %s26, 0
      %p336 = por %p334, %p335
      %p337 = scmp.le.s32.totalorder 1, %s20
      %p338 = scmp.lt.s32.totalorder %s20, 5
      %p339 = pnand %p337, %p338
      %p340 = pneg %p339
      // Predicated region
      $region9: #{tpu_custom_call.1} parent=5 // pred_check
        _
      $region10: #{tpu_custom_call.1} parent=5 // pred_check_branch
        %342 = sbr.rel (%p339) target = $region12
      $region11: #{tpu_custom_call.1} parent=5 // pred_region
        %s343 = ssub.s32 %s20, 1
        // Predicated region
        $region13: #{tpu_custom_call.1} parent=11 // pred_check
          %p344 = pneg %p261
        $region14: #{tpu_custom_call.1} parent=11 // pred_check_branch
          %346 = sbr.rel (%p344) target = $region16
        $region15: #{tpu_custom_call.1} parent=11 // pred_region
          _
        $region16: #{tpu_custom_call.1} parent=11 // pred_fallthru
          _
        // Predicated region
        $region17: #{tpu_custom_call.1} parent=11 // pred_check
          %p347 = pneg %p282
        $region18: #{tpu_custom_call.1} parent=11 // pred_check_branch
          %349 = sbr.rel (%p347) target = $region20
        $region19: #{tpu_custom_call.1} parent=11 // pred_region
          _
        $region20: #{tpu_custom_call.1} parent=11 // pred_fallthru
          _
        // Predicated region
        $region21: #{tpu_custom_call.1} parent=11 // pred_check
          %p350 = pneg %p303
        $region22: #{tpu_custom_call.1} parent=11 // pred_check_branch
          %352 = sbr.rel (%p350) target = $region24
        $region23: #{tpu_custom_call.1} parent=11 // pred_region
          _
        $region24: #{tpu_custom_call.1} parent=11 // pred_fallthru
          _
      $region12: #{tpu_custom_call.1} parent=5 // pred_fallthru
        _
      %p353 = scmp.lt.s32.totalorder %s20, 4
      // Predicated region
      $region25: #{tpu_custom_call.1} parent=5 // pred_check
        %p354 = pneg %p353
      $region26: #{tpu_custom_call.1} parent=5 // pred_check_branch
        %356 = sbr.rel (%p354) target = $region28
      $region27: #{tpu_custom_call.1} parent=5 // pred_region
        // Predicated region
        $region29: #{tpu_custom_call.1} parent=27 // pred_check
          %p357 = pneg %p52
        $region30: #{tpu_custom_call.1} parent=27 // pred_check_branch
          %359 = sbr.rel (%p357) target = $region32
        $region31: #{tpu_custom_call.1} parent=27 // pred_region
          %p360 = scmp.lt.s32.totalorder %s27, 1
          %s361 = scalar_select %p360, %s27, 1
          %s362 = smul.addr %s361, 8
          %s363 = scalar_lea.vmem %s0, %s362
        $region32: #{tpu_custom_call.1} parent=27 // pred_fallthru
          _
        // Predicated region
        $region33: #{tpu_custom_call.1} parent=27 // pred_check
          %p364 = pneg %p78
        $region34: #{tpu_custom_call.1} parent=27 // pred_check_branch
          %366 = sbr.rel (%p364) target = $region36
        $region35: #{tpu_custom_call.1} parent=27 // pred_region
          %p367 = scmp.lt.s32.totalorder %s28, 1
          %s368 = scalar_select %p367, %s28, 1
          %s369 = smul.addr %s368, 48
          %s370 = smul.addr %s369, 4
          %s371 = scalar_lea.vmem %s1, %s370
        $region36: #{tpu_custom_call.1} parent=27 // pred_fallthru
          _
        // Predicated region
        $region37: #{tpu_custom_call.1} parent=27 // pred_check
          %p372 = pneg %p104
        $region38: #{tpu_custom_call.1} parent=27 // pred_check_branch
          %374 = sbr.rel (%p372) target = $region40
        $region39: #{tpu_custom_call.1} parent=27 // pred_region
          %p375 = scmp.lt.s32.totalorder %s28, 1
          %s376 = scalar_select %p375, %s28, 1
          %s377 = smul.addr %s376, 12
          %s378 = scalar_lea.vmem %s2, %s377
        $region40: #{tpu_custom_call.1} parent=27 // pred_fallthru
          _
        // Predicated region
        $region41: #{tpu_custom_call.1} parent=27 // pred_check
          %p379 = pneg %p130
        $region42: #{tpu_custom_call.1} parent=27 // pred_check_branch
          %381 = sbr.rel (%p379) target = $region44
        $region43: #{tpu_custom_call.1} parent=27 // pred_region
          %p382 = scmp.lt.s32.totalorder %s28, 1
          %s383 = scalar_select %p382, %s28, 1
          %s384 = smul.addr %s383, 4
          %s385 = smul.addr %s384, 4
          %s386 = scalar_lea.vmem %s3, %s385
        $region44: #{tpu_custom_call.1} parent=27 // pred_fallthru
          _
        // Predicated region
        $region45: #{tpu_custom_call.1} parent=27 // pred_check
          %p387 = pneg %p156
        $region46: #{tpu_custom_call.1} parent=27 // pred_check_branch
          %389 = sbr.rel (%p387) target = $region48
        $region47: #{tpu_custom_call.1} parent=27 // pred_region
          %p390 = scmp.lt.s32.totalorder %s28, 1
          %s391 = scalar_select %p390, %s28, 1
          %s392 = smul.addr %s391, 4
          %s393 = smul.addr %s392, 4
          %s394 = scalar_lea.vmem %s4, %s393
        $region48: #{tpu_custom_call.1} parent=27 // pred_fallthru
          _
        // Predicated region
        $region49: #{tpu_custom_call.1} parent=27 // pred_check
          %p395 = pneg %p182
        $region50: #{tpu_custom_call.1} parent=27 // pred_check_branch
          %397 = sbr.rel (%p395) target = $region52
        $region51: #{tpu_custom_call.1} parent=27 // pred_region
          %p398 = scmp.lt.s32.totalorder %s28, 1
          %s399 = scalar_select %p398, %s28, 1
          %s400 = scalar_lea.vmem %s5, %s399
        $region52: #{tpu_custom_call.1} parent=27 // pred_fallthru
          _
        // Predicated region
        $region53: #{tpu_custom_call.1} parent=27 // pred_check
          %p401 = pneg %p208
        $region54: #{tpu_custom_call.1} parent=27 // pred_check_branch
          %403 = sbr.rel (%p401) target = $region56
        $region55: #{tpu_custom_call.1} parent=27 // pred_region
          %p404 = scmp.lt.s32.totalorder %s28, 1
          %s405 = scalar_select %p404, %s28, 1
          %s406 = smul.addr %s405, 16
          %s407 = smul.addr %s406, 4
          %s408 = scalar_lea.vmem %s6, %s407
        $region56: #{tpu_custom_call.1} parent=27 // pred_fallthru
          _
        // Predicated region
        $region57: #{tpu_custom_call.1} parent=27 // pred_check
          %p409 = pneg %p234
        $region58: #{tpu_custom_call.1} parent=27 // pred_check_branch
          %411 = sbr.rel (%p409) target = $region60
        $region59: #{tpu_custom_call.1} parent=27 // pred_region
          %p412 = scmp.lt.s32.totalorder %s28, 1
          %s413 = scalar_select %p412, %s28, 1
          %s414 = smul.addr %s413, 8
          %s415 = scalar_lea.vmem %s7, %s414
        $region60: #{tpu_custom_call.1} parent=27 // pred_fallthru
          _
      $region28: #{tpu_custom_call.1} parent=5 // pred_fallthru
        _
      %p416 = scmp.le.s32.totalorder 1, %s20
      %p417 = scmp.lt.s32.totalorder %s20, 5
      %p418 = pnand %p416, %p417
      %p419 = pneg %p418
      // Predicated region
      $region61: #{tpu_custom_call.1} parent=5 // pred_check
        _
      $region62: #{tpu_custom_call.1} parent=5 // pred_check_branch
        %421 = sbr.rel (%p418) target = $region64
      $region63: #{tpu_custom_call.1} parent=5 // pred_region
        %s422 = ssub.s32 %s20, 1
        %p423 = scmp.lt.s32.totalorder %s29, 1
        %s424 = scalar_select %p423, %s29, 1
        %s425 = smul.addr %s424, 8
        %s426 = scalar_lea.vmem %s0, %s425
        %p427 = pneg %p58
        %p428 = pneg %p55
        %p429 = scmp.lt.s32.totalorder %s30, 1
        %s430 = scalar_select %p429, %s30, 1
        %s431 = smul.addr %s430, 48
        %s432 = smul.addr %s431, 4
        %s433 = scalar_lea.vmem %s1, %s432
        %p434 = pneg %p84
        %p435 = pneg %p81
        %p436 = scmp.lt.s32.totalorder %s30, 1
        %s437 = scalar_select %p436, %s30, 1
        %s438 = smul.addr %s437, 12
        %s439 = scalar_lea.vmem %s2, %s438
        %p440 = pneg %p110
        %p441 = pneg %p107
        %p442 = scmp.lt.s32.totalorder %s30, 1
        %s443 = scalar_select %p442, %s30, 1
        %s444 = smul.addr %s443, 4
        %s445 = smul.addr %s444, 4
        %s446 = scalar_lea.vmem %s3, %s445
        %p447 = pneg %p136
        %p448 = pneg %p133
        %p449 = scmp.lt.s32.totalorder %s30, 1
        %s450 = scalar_select %p449, %s30, 1
        %s451 = smul.addr %s450, 4
        %s452 = smul.addr %s451, 4
        %s453 = scalar_lea.vmem %s4, %s452
        %p454 = pneg %p162
        %p455 = pneg %p159
        %p456 = scmp.lt.s32.totalorder %s30, 1
        %s457 = scalar_select %p456, %s30, 1
        %s458 = scalar_lea.vmem %s5, %s457
        %p459 = pneg %p188
        %p460 = pneg %p185
        %p461 = scmp.lt.s32.totalorder %s30, 1
        %s462 = scalar_select %p461, %s30, 1
        %s463 = smul.addr %s462, 16
        %s464 = smul.addr %s463, 4
        %s465 = scalar_lea.vmem %s6, %s464
        %p466 = pneg %p214
        %p467 = pneg %p211
        %p468 = scmp.lt.s32.totalorder %s30, 1
        %s469 = scalar_select %p468, %s30, 1
        %s470 = smul.addr %s469, 8
        %s471 = scalar_lea.vmem %s7, %s470
        %p472 = pneg %p240
        %p473 = pneg %p237
        %p474 = pneg %p261
        %p475 = pneg %p258
        %p476 = pneg %p282
        %p477 = pneg %p279
        %p478 = pneg %p303
        %p479 = pneg %p300
        %p480 = pneg %p329
        %p481 = pneg %p326
        %s482 = sand.u32 %s316, 1
        %s483 = scalar_lea.sflag [#allocation4], %s482
        %s484 = sand.u32 %s316, 1
        %s485 = smul.addr %s484, 16
        %s486 = scalar_lea.vmem [#allocation3], %s485
        %p487 = scmp.lt.s32.totalorder %s29, 1
        %s488 = scalar_select %p487, %s29, 1
        %s489 = smul.addr %s488, 8
        %s490 = scalar_lea.vmem %s0, %s489
        %p491 = scmp.lt.s32.totalorder %s30, 1
        %s492 = scalar_select %p491, %s30, 1
        %s493 = smul.addr %s492, 48
        %s494 = smul.addr %s493, 4
        %s495 = scalar_lea.vmem %s1, %s494
        %p496 = scmp.lt.s32.totalorder %s30, 1
        %s497 = scalar_select %p496, %s30, 1
        %s498 = smul.addr %s497, 12
        %s499 = scalar_lea.vmem %s2, %s498
        %p500 = scmp.lt.s32.totalorder %s30, 1
        %s501 = scalar_select %p500, %s30, 1
        %s502 = smul.addr %s501, 4
        %s503 = smul.addr %s502, 4
        %s504 = scalar_lea.vmem %s3, %s503
        %p505 = scmp.lt.s32.totalorder %s30, 1
        %s506 = scalar_select %p505, %s30, 1
        %s507 = smul.addr %s506, 4
        %s508 = smul.addr %s507, 4
        %s509 = scalar_lea.vmem %s4, %s508
        %p510 = scmp.lt.s32.totalorder %s30, 1
        %s511 = scalar_select %p510, %s30, 1
        %s512 = scalar_lea.vmem %s5, %s511
        %p513 = scmp.lt.s32.totalorder %s30, 1
        %s514 = scalar_select %p513, %s30, 1
        %s515 = smul.addr %s514, 16
        %s516 = smul.addr %s515, 4
        %s517 = scalar_lea.vmem %s6, %s516
        %p518 = scmp.lt.s32.totalorder %s30, 1
        %s519 = scalar_select %p518, %s30, 1
        %s520 = smul.addr %s519, 8
        %s521 = scalar_lea.vmem %s7, %s520
        %p523 = scmp.eq.s32.totalorder %s30, 0
        // Predicated region
        $region65: #{tpu_custom_call.1} parent=63 // pred_check
          %p524 = pneg %p523
        $region66: #{tpu_custom_call.1} parent=63 // pred_check_branch
          %526 = sbr.rel (%p524) target = $region68
        $region67: #{tpu_custom_call.1} parent=63 // pred_region
          %v527 = vld [vmem:[%s490] sm:$0xff]
          %vm528 = vcmask 261120
          %529 = vst.msk [vmem:[#allocation2] sm:$0xff] %vm528, %v527
        $region68: #{tpu_custom_call.1} parent=63 // pred_fallthru
          _
        %v530 = vld [vmem:[#allocation2] sm:$0xff]
        %v531 = vld [vmem:[%s521] sm:$0x1]
        %v532 = vld [vmem:[%s521 + $0x1] sm:$0x1]
        %v533 = vld [vmem:[%s521 + $0x2] sm:$0x1]
        %v534 = vld [vmem:[%s521 + $0x3] sm:$0x1]
        %v535 = vld [vmem:[%s521 + $0x4] sm:$0x1]
        %v536 = vld [vmem:[%s521 + $0x5] sm:$0x1]
        %vm537 = vcmask 261120
        %v538 = vsel %vm537, %v530, 0.0
        %539 = vadd.xlane.f32.xlu0 %v538
        %v540 = vpop.xlane.xlu0 %539
        %v541 = vrcp.pop 32.0
        %v542 = vmul.f32 %v540, %v541
        %v543 = vsub.f32 %v530, %v542
        %v544 = vmul.f32 %v543, %v543
        %v545 = vsel %vm537, %v544, 0.0
        %546 = vadd.xlane.f32.xlu0 %v545
        %v547 = vpop.xlane.xlu0 %546
        %v548 = vmul.f32 %v547, %v541
        %v549 = vadd.f32 %v548, 1e-05
        %v550 = vrsqrt.pop %v549
        %v551 = vmul.f32 %v543, %v550
        %v552 = vlaneseq
        %v553 = vshrl.u32 %v552, 7
        %v554 = vsub.s32 0, %v553
        %v555 = vrot.slane %v531, %v554
        %v556 = vmul.f32 %v551, %v555
        %v557 = vlaneseq
        %v558 = vshrl.u32 %v557, 7
        %v559 = vsub.s32 0, %v558
        %v560 = vrot.slane %v532, %v559
        %v561 = vadd.f32 %v556, %v560
        %v562 = vpack.c.bf16 %v561, %v561
        %v563 = vld [vmem:[%s495] sm:$0xf]
        %v564 = vld [vmem:[%s495 + $0x4] sm:$0xf]
        %v565 = vld [vmem:[%s495 + $0x8] sm:$0xf]
        %v566 = vld [vmem:[%s495 + $0xc] sm:$0xf]
        %v567 = vld [vmem:[%s495 + $0x10] sm:$0xf]
        %v568 = vld [vmem:[%s495 + $0x14] sm:$0xf]
        %v569 = vld [vmem:[%s495 + $0x18] sm:$0xf]
        %v570 = vld [vmem:[%s495 + $0x1c] sm:$0xf]
        %v571 = vld [vmem:[%s495 + $0x20] sm:$0xf]
        %v572 = vld [vmem:[%s495 + $0x24] sm:$0xf]
        %v573 = vld [vmem:[%s495 + $0x28] sm:$0xf]
        %v574 = vld [vmem:[%s495 + $0x2c] sm:$0xf]
        %v575 = vld [vmem:[%s495 + $0x30] sm:$0xf]
        %v576 = vld [vmem:[%s495 + $0x34] sm:$0xf]
        %v577 = vld [vmem:[%s495 + $0x38] sm:$0xf]
        %v578 = vld [vmem:[%s495 + $0x3c] sm:$0xf]
        %v579 = vld [vmem:[%s499] sm:$0x1]
        %v580 = vld [vmem:[%s499 + $0x1] sm:$0x1]
        %v581 = vld [vmem:[%s499 + $0x2] sm:$0x1]
        %v582 = vld [vmem:[%s499 + $0x3] sm:$0x1]
        %v587 = vlaneseq
        %v588 = vshrl.u32 %v587, 7
        %v589 = vsub.s32 0, %v588
        %v590 = vrot.slane %v579, %v589
        %v591 = vlaneseq
        %v592 = vshrl.u32 %v591, 7
        %v593 = vsub.s32 0, %v592
        %v594 = vrot.slane %v580, %v593
        %v595 = vlaneseq
        %v596 = vshrl.u32 %v595, 7
        %v597 = vsub.s32 0, %v596
        %v598 = vrot.slane %v581, %v597
        %v599 = vlaneseq
        %v600 = vshrl.u32 %v599, 7
        %v601 = vsub.s32 0, %v600
        %v602 = vrot.slane %v582, %v601
        %v611 = vunpack.c.l.b16 %v563
        %v612 = vunpack.c.l.b16 %v564
        %v613 = vunpack.c.l.b16 %v565
        %v614 = vunpack.c.l.b16 %v566
        %v615 = vpack.c.b16 %v612, %v611
        %v616 = vpack.c.b16 %v614, %v613
        %v620 = vsel %vm537, %v562, 0
        %622 = vmatprep.subr.bf16.mxu0 0
        %623 = vmatpush1.bf16.msra.mxu0 %v615
        %624 = vmatprep.subr.bf16.mxu0 0
        %625 = vmatpush1.bf16.msra.mxu0 %v616
        %626 = vmatprep.subr.bf16.mxu0 0
        %627 = vmatpush1.bf16.msra.mxu0 0
        %628 = vmatprep.subr.bf16.mxu0 0
        %629 = vmatpush1.bf16.msra.mxu0 0
        %630 = vmatprep.subr.bf16.mxu0 0
        %631 = vmatpush1.bf16.msra.mxu0 0
        %632 = vmatprep.subr.bf16.mxu0 0
        %633 = vmatpush1.bf16.msra.mxu0 0
        %634 = vmatprep.subr.bf16.mxu0 0
        %635 = vmatpush1.bf16.msra.mxu0 0
        %636 = vmatprep.subr.bf16.mxu0 0
        %637 = vmatpush1.bf16.msra.mxu0 0
        %638 = vmatprep.subr.bf16.mxu0 0
        %639 = vmatpush1.bf16.msra.mxu0 0
        %640 = vmatprep.subr.bf16.mxu0 0
        %641 = vmatpush1.bf16.msra.mxu0 0
        %642 = vmatprep.subr.bf16.mxu0 0
        %643 = vmatpush1.bf16.msra.mxu0 0
        %644 = vmatprep.subr.bf16.mxu0 0
        %645 = vmatpush1.bf16.msra.mxu0 0
        %646 = vmatprep.subr.bf16.mxu0 0
        %647 = vmatpush1.bf16.msra.mxu0 0
        %648 = vmatprep.subr.bf16.mxu0 0
        %649 = vmatpush1.bf16.msra.mxu0 0
        %650 = vmatprep.subr.bf16.mxu0 0
        %651 = vmatpush1.bf16.msra.mxu0 0
        %652 = vmatprep.subr.bf16.mxu0 0
        %653 = vmatpush1.bf16.msra.mxu0 0
        %654 = vmatprep.mubr.bf16.mxu0 0
        %655 = vmatmul.mubr.bf16.gmra.mrb[0].mxu0 %v620
        %v656 = vpop.f32.mrb[0].mxu0
        %v657 = vadd.f32 %v590, %v656
        %v658 = vpop.f32.mrb[0].mxu0
        %v659 = vpop.f32.mrb[0].mxu0
        %v660 = vpop.f32.mrb[0].mxu0
        %661 = vdwg.mxu0
        %v666 = vunpack.c.l.b16 %v567
        %v667 = vunpack.c.l.b16 %v568
        %v668 = vunpack.c.l.b16 %v569
        %v669 = vunpack.c.l.b16 %v570
        %v670 = vpack.c.b16 %v667, %v666
        %v671 = vpack.c.b16 %v669, %v668
        %674 = vmatprep.subr.bf16.mxu0 0
        %675 = vmatpush1.bf16.msra.mxu0 %v670
        %676 = vmatprep.subr.bf16.mxu0 0
        %677 = vmatpush1.bf16.msra.mxu0 %v671
        %678 = vmatprep.subr.bf16.mxu0 0
        %679 = vmatpush1.bf16.msra.mxu0 0
        %680 = vmatprep.subr.bf16.mxu0 0
        %681 = vmatpush1.bf16.msra.mxu0 0
        %682 = vmatprep.subr.bf16.mxu0 0
        %683 = vmatpush1.bf16.msra.mxu0 0
        %684 = vmatprep.subr.bf16.mxu0 0
        %685 = vmatpush1.bf16.msra.mxu0 0
        %686 = vmatprep.subr.bf16.mxu0 0
        %687 = vmatpush1.bf16.msra.mxu0 0
        %688 = vmatprep.subr.bf16.mxu0 0
        %689 = vmatpush1.bf16.msra.mxu0 0
        %690 = vmatprep.subr.bf16.mxu0 0
        %691 = vmatpush1.bf16.msra.mxu0 0
        %692 = vmatprep.subr.bf16.mxu0 0
        %693 = vmatpush1.bf16.msra.mxu0 0
        %694 = vmatprep.subr.bf16.mxu0 0
        %695 = vmatpush1.bf16.msra.mxu0 0
        %696 = vmatprep.subr.bf16.mxu0 0
        %697 = vmatpush1.bf16.msra.mxu0 0
        %698 = vmatprep.subr.bf16.mxu0 0
        %699 = vmatpush1.bf16.msra.mxu0 0
        %700 = vmatprep.subr.bf16.mxu0 0
        %701 = vmatpush1.bf16.msra.mxu0 0
        %702 = vmatprep.subr.bf16.mxu0 0
        %703 = vmatpush1.bf16.msra.mxu0 0
        %704 = vmatprep.subr.bf16.mxu0 0
        %705 = vmatpush1.bf16.msra.mxu0 0
        %706 = vmatprep.mubr.bf16.mxu0 0
        %707 = vmatmul.mubr.bf16.gmra.mrb[0].mxu0 %v620
        %v708 = vpop.f32.mrb[0].mxu0
        %v709 = vadd.f32 %v594, %v708
        %v710 = vpop.f32.mrb[0].mxu0
        %v711 = vpop.f32.mrb[0].mxu0
        %v712 = vpop.f32.mrb[0].mxu0
        %713 = vdwg.mxu0
        %v718 = vunpack.c.l.b16 %v571
        %v719 = vunpack.c.l.b16 %v572
        %v720 = vunpack.c.l.b16 %v573
        %v721 = vunpack.c.l.b16 %v574
        %v722 = vpack.c.b16 %v719, %v718
        %v723 = vpack.c.b16 %v721, %v720
        %726 = vmatprep.subr.bf16.mxu0 0
        %727 = vmatpush1.bf16.msra.mxu0 %v722
        %728 = vmatprep.subr.bf16.mxu0 0
        %729 = vmatpush1.bf16.msra.mxu0 %v723
        %730 = vmatprep.subr.bf16.mxu0 0
        %731 = vmatpush1.bf16.msra.mxu0 0
        %732 = vmatprep.subr.bf16.mxu0 0
        %733 = vmatpush1.bf16.msra.mxu0 0
        %734 = vmatprep.subr.bf16.mxu0 0
        %735 = vmatpush1.bf16.msra.mxu0 0
        %736 = vmatprep.subr.bf16.mxu0 0
        %737 = vmatpush1.bf16.msra.mxu0 0
        %738 = vmatprep.subr.bf16.mxu0 0
        %739 = vmatpush1.bf16.msra.mxu0 0
        %740 = vmatprep.subr.bf16.mxu0 0
        %741 = vmatpush1.bf16.msra.mxu0 0
        %742 = vmatprep.subr.bf16.mxu0 0
        %743 = vmatpush1.bf16.msra.mxu0 0
        %744 = vmatprep.subr.bf16.mxu0 0
        %745 = vmatpush1.bf16.msra.mxu0 0
        %746 = vmatprep.subr.bf16.mxu0 0
        %747 = vmatpush1.bf16.msra.mxu0 0
        %748 = vmatprep.subr.bf16.mxu0 0
        %749 = vmatpush1.bf16.msra.mxu0 0
        %750 = vmatprep.subr.bf16.mxu0 0
        %751 = vmatpush1.bf16.msra.mxu0 0
        %752 = vmatprep.subr.bf16.mxu0 0
        %753 = vmatpush1.bf16.msra.mxu0 0
        %754 = vmatprep.subr.bf16.mxu0 0
        %755 = vmatpush1.bf16.msra.mxu0 0
        %756 = vmatprep.subr.bf16.mxu0 0
        %757 = vmatpush1.bf16.msra.mxu0 0
        %758 = vmatprep.mubr.bf16.mxu0 0
        %759 = vmatmul.mubr.bf16.gmra.mrb[0].mxu0 %v620
        %v760 = vpop.f32.mrb[0].mxu0
        %v761 = vadd.f32 %v598, %v760
        %v762 = vpop.f32.mrb[0].mxu0
        %v763 = vpop.f32.mrb[0].mxu0
        %v764 = vpop.f32.mrb[0].mxu0
        %765 = vdwg.mxu0
        %v770 = vunpack.c.l.b16 %v575
        %v771 = vunpack.c.l.b16 %v576
        %v772 = vunpack.c.l.b16 %v577
        %v773 = vunpack.c.l.b16 %v578
        %v774 = vpack.c.b16 %v771, %v770
        %v775 = vpack.c.b16 %v773, %v772
        %778 = vmatprep.subr.bf16.mxu0 0
        %779 = vmatpush1.bf16.msra.mxu0 %v774
        %780 = vmatprep.subr.bf16.mxu0 0
        %781 = vmatpush1.bf16.msra.mxu0 %v775
        %782 = vmatprep.subr.bf16.mxu0 0
        %783 = vmatpush1.bf16.msra.mxu0 0
        %784 = vmatprep.subr.bf16.mxu0 0
        %785 = vmatpush1.bf16.msra.mxu0 0
        %786 = vmatprep.subr.bf16.mxu0 0
        %787 = vmatpush1.bf16.msra.mxu0 0
        %788 = vmatprep.subr.bf16.mxu0 0
        %789 = vmatpush1.bf16.msra.mxu0 0
        %790 = vmatprep.subr.bf16.mxu0 0
        %791 = vmatpush1.bf16.msra.mxu0 0
        %792 = vmatprep.subr.bf16.mxu0 0
        %793 = vmatpush1.bf16.msra.mxu0 0
        %794 = vmatprep.subr.bf16.mxu0 0
        %795 = vmatpush1.bf16.msra.mxu0 0
        %796 = vmatprep.subr.bf16.mxu0 0
        %797 = vmatpush1.bf16.msra.mxu0 0
        %798 = vmatprep.subr.bf16.mxu0 0
        %799 = vmatpush1.bf16.msra.mxu0 0
        %800 = vmatprep.subr.bf16.mxu0 0
        %801 = vmatpush1.bf16.msra.mxu0 0
        %802 = vmatprep.subr.bf16.mxu0 0
        %803 = vmatpush1.bf16.msra.mxu0 0
        %804 = vmatprep.subr.bf16.mxu0 0
        %805 = vmatpush1.bf16.msra.mxu0 0
        %806 = vmatprep.subr.bf16.mxu0 0
        %807 = vmatpush1.bf16.msra.mxu0 0
        %808 = vmatprep.subr.bf16.mxu0 0
        %809 = vmatpush1.bf16.msra.mxu0 0
        %810 = vmatprep.mubr.bf16.mxu0 0
        %811 = vmatmul.mubr.bf16.gmra.mrb[0].mxu0 %v620
        %v812 = vpop.f32.mrb[0].mxu0
        %v813 = vadd.f32 %v602, %v812
        %v814 = vpop.f32.mrb[0].mxu0
        %v815 = vpop.f32.mrb[0].mxu0
        %v816 = vpop.f32.mrb[0].mxu0
        %817 = vdwg.mxu0
        %s818 = scalar_lea.vmem %s495, 64
        %v819 = vld [vmem:[%s818] sm:$0xf]
        %v820 = vld [vmem:[%s818 + $0x4] sm:$0xf]
        %v821 = vld [vmem:[%s818 + $0x8] sm:$0xf]
        %v822 = vld [vmem:[%s818 + $0xc] sm:$0xf]
        %v823 = vld [vmem:[%s818 + $0x10] sm:$0xf]
        %v824 = vld [vmem:[%s818 + $0x14] sm:$0xf]
        %v825 = vld [vmem:[%s818 + $0x18] sm:$0xf]
        %v826 = vld [vmem:[%s818 + $0x1c] sm:$0xf]
        %v827 = vld [vmem:[%s818 + $0x20] sm:$0xf]
        %v828 = vld [vmem:[%s818 + $0x24] sm:$0xf]
        %v829 = vld [vmem:[%s818 + $0x28] sm:$0xf]
        %v830 = vld [vmem:[%s818 + $0x2c] sm:$0xf]
        %v831 = vld [vmem:[%s818 + $0x30] sm:$0xf]
        %v832 = vld [vmem:[%s818 + $0x34] sm:$0xf]
        %v833 = vld [vmem:[%s818 + $0x38] sm:$0xf]
        %v834 = vld [vmem:[%s818 + $0x3c] sm:$0xf]
        %s835 = scalar_lea.vmem %s499, 4
        %v836 = vld [vmem:[%s835] sm:$0x1]
        %v837 = vld [vmem:[%s835 + $0x1] sm:$0x1]
        %v838 = vld [vmem:[%s835 + $0x2] sm:$0x1]
        %v839 = vld [vmem:[%s835 + $0x3] sm:$0x1]
        %v844 = vlaneseq
        %v845 = vshrl.u32 %v844, 7
        %v846 = vsub.s32 0, %v845
        %v847 = vrot.slane %v836, %v846
        %v848 = vlaneseq
        %v849 = vshrl.u32 %v848, 7
        %v850 = vsub.s32 0, %v849
        %v851 = vrot.slane %v837, %v850
        %v852 = vlaneseq
        %v853 = vshrl.u32 %v852, 7
        %v854 = vsub.s32 0, %v853
        %v855 = vrot.slane %v838, %v854
        %v856 = vlaneseq
        %v857 = vshrl.u32 %v856, 7
        %v858 = vsub.s32 0, %v857
        %v859 = vrot.slane %v839, %v858
        %v868 = vunpack.c.l.b16 %v819
        %v869 = vunpack.c.l.b16 %v820
        %v870 = vunpack.c.l.b16 %v821
        %v871 = vunpack.c.l.b16 %v822
        %v872 = vpack.c.b16 %v869, %v868
        %v873 = vpack.c.b16 %v871, %v870
        %876 = vmatprep.subr.bf16.mxu0 0
        %877 = vmatpush1.bf16.msra.mxu0 %v872
        %878 = vmatprep.subr.bf16.mxu0 0
        %879 = vmatpush1.bf16.msra.mxu0 %v873
        %880 = vmatprep.subr.bf16.mxu0 0
        %881 = vmatpush1.bf16.msra.mxu0 0
        %882 = vmatprep.subr.bf16.mxu0 0
        %883 = vmatpush1.bf16.msra.mxu0 0
        %884 = vmatprep.subr.bf16.mxu0 0
        %885 = vmatpush1.bf16.msra.mxu0 0
        %886 = vmatprep.subr.bf16.mxu0 0
        %887 = vmatpush1.bf16.msra.mxu0 0
        %888 = vmatprep.subr.bf16.mxu0 0
        %889 = vmatpush1.bf16.msra.mxu0 0
        %890 = vmatprep.subr.bf16.mxu0 0
        %891 = vmatpush1.bf16.msra.mxu0 0
        %892 = vmatprep.subr.bf16.mxu0 0
        %893 = vmatpush1.bf16.msra.mxu0 0
        %894 = vmatprep.subr.bf16.mxu0 0
        %895 = vmatpush1.bf16.msra.mxu0 0
        %896 = vmatprep.subr.bf16.mxu0 0
        %897 = vmatpush1.bf16.msra.mxu0 0
        %898 = vmatprep.subr.bf16.mxu0 0
        %899 = vmatpush1.bf16.msra.mxu0 0
        %900 = vmatprep.subr.bf16.mxu0 0
        %901 = vmatpush1.bf16.msra.mxu0 0
        %902 = vmatprep.subr.bf16.mxu0 0
        %903 = vmatpush1.bf16.msra.mxu0 0
        %904 = vmatprep.subr.bf16.mxu0 0
        %905 = vmatpush1.bf16.msra.mxu0 0
        %906 = vmatprep.subr.bf16.mxu0 0
        %907 = vmatpush1.bf16.msra.mxu0 0
        %908 = vmatprep.mubr.bf16.mxu0 0
        %909 = vmatmul.mubr.bf16.gmra.mrb[0].mxu0 %v620
        %v910 = vpop.f32.mrb[0].mxu0
        %v911 = vadd.f32 %v847, %v910
        %v912 = vpop.f32.mrb[0].mxu0
        %v913 = vpop.f32.mrb[0].mxu0
        %v914 = vpop.f32.mrb[0].mxu0
        %915 = vdwg.mxu0
        %v920 = vunpack.c.l.b16 %v823
        %v921 = vunpack.c.l.b16 %v824
        %v922 = vunpack.c.l.b16 %v825
        %v923 = vunpack.c.l.b16 %v826
        %v924 = vpack.c.b16 %v921, %v920
        %v925 = vpack.c.b16 %v923, %v922
        %928 = vmatprep.subr.bf16.mxu0 0
        %929 = vmatpush1.bf16.msra.mxu0 %v924
        %930 = vmatprep.subr.bf16.mxu0 0
        %931 = vmatpush1.bf16.msra.mxu0 %v925
        %932 = vmatprep.subr.bf16.mxu0 0
        %933 = vmatpush1.bf16.msra.mxu0 0
        %934 = vmatprep.subr.bf16.mxu0 0
        %935 = vmatpush1.bf16.msra.mxu0 0
        %936 = vmatprep.subr.bf16.mxu0 0
        %937 = vmatpush1.bf16.msra.mxu0 0
        %938 = vmatprep.subr.bf16.mxu0 0
        %939 = vmatpush1.bf16.msra.mxu0 0
        %940 = vmatprep.subr.bf16.mxu0 0
        %941 = vmatpush1.bf16.msra.mxu0 0
        %942 = vmatprep.subr.bf16.mxu0 0
        %943 = vmatpush1.bf16.msra.mxu0 0
        %944 = vmatprep.subr.bf16.mxu0 0
        %945 = vmatpush1.bf16.msra.mxu0 0
        %946 = vmatprep.subr.bf16.mxu0 0
        %947 = vmatpush1.bf16.msra.mxu0 0
        %948 = vmatprep.subr.bf16.mxu0 0
        %949 = vmatpush1.bf16.msra.mxu0 0
        %950 = vmatprep.subr.bf16.mxu0 0
        %951 = vmatpush1.bf16.msra.mxu0 0
        %952 = vmatprep.subr.bf16.mxu0 0
        %953 = vmatpush1.bf16.msra.mxu0 0
        %954 = vmatprep.subr.bf16.mxu0 0
        %955 = vmatpush1.bf16.msra.mxu0 0
        %956 = vmatprep.subr.bf16.mxu0 0
        %957 = vmatpush1.bf16.msra.mxu0 0
        %958 = vmatprep.subr.bf16.mxu0 0
        %959 = vmatpush1.bf16.msra.mxu0 0
        %960 = vmatprep.mubr.bf16.mxu0 0
        %961 = vmatmul.mubr.bf16.gmra.mrb[0].mxu0 %v620
        %v962 = vpop.f32.mrb[0].mxu0
        %v963 = vadd.f32 %v851, %v962
        %v964 = vpop.f32.mrb[0].mxu0
        %v965 = vpop.f32.mrb[0].mxu0
        %v966 = vpop.f32.mrb[0].mxu0
        %967 = vdwg.mxu0
        %v972 = vunpack.c.l.b16 %v827
        %v973 = vunpack.c.l.b16 %v828
        %v974 = vunpack.c.l.b16 %v829
        %v975 = vunpack.c.l.b16 %v830
        %v976 = vpack.c.b16 %v973, %v972
        %v977 = vpack.c.b16 %v975, %v974
        %980 = vmatprep.subr.bf16.mxu0 0
        %981 = vmatpush1.bf16.msra.mxu0 %v976
        %982 = vmatprep.subr.bf16.mxu0 0
        %983 = vmatpush1.bf16.msra.mxu0 %v977
        %984 = vmatprep.subr.bf16.mxu0 0
        %985 = vmatpush1.bf16.msra.mxu0 0
        %986 = vmatprep.subr.bf16.mxu0 0
        %987 = vmatpush1.bf16.msra.mxu0 0
        %988 = vmatprep.subr.bf16.mxu0 0
        %989 = vmatpush1.bf16.msra.mxu0 0
        %990 = vmatprep.subr.bf16.mxu0 0
        %991 = vmatpush1.bf16.msra.mxu0 0
        %992 = vmatprep.subr.bf16.mxu0 0
        %993 = vmatpush1.bf16.msra.mxu0 0
        %994 = vmatprep.subr.bf16.mxu0 0
        %995 = vmatpush1.bf16.msra.mxu0 0
        %996 = vmatprep.subr.bf16.mxu0 0
        %997 = vmatpush1.bf16.msra.mxu0 0
        %998 = vmatprep.subr.bf16.mxu0 0
        %999 = vmatpush1.bf16.msra.mxu0 0
        %1000 = vmatprep.subr.bf16.mxu0 0
        %1001 = vmatpush1.bf16.msra.mxu0 0
        %1002 = vmatprep.subr.bf16.mxu0 0
        %1003 = vmatpush1.bf16.msra.mxu0 0
        %1004 = vmatprep.subr.bf16.mxu0 0
        %1005 = vmatpush1.bf16.msra.mxu0 0
        %1006 = vmatprep.subr.bf16.mxu0 0
        %1007 = vmatpush1.bf16.msra.mxu0 0
        %1008 = vmatprep.subr.bf16.mxu0 0
        %1009 = vmatpush1.bf16.msra.mxu0 0
        %1010 = vmatprep.subr.bf16.mxu0 0
        %1011 = vmatpush1.bf16.msra.mxu0 0
        %1012 = vmatprep.mubr.bf16.mxu0 0
        %1013 = vmatmul.mubr.bf16.gmra.mrb[0].mxu0 %v620
        %v1014 = vpop.f32.mrb[0].mxu0
        %v1015 = vadd.f32 %v855, %v1014
        %v1016 = vpop.f32.mrb[0].mxu0
        %v1017 = vpop.f32.mrb[0].mxu0
        %v1018 = vpop.f32.mrb[0].mxu0
        %1019 = vdwg.mxu0
        %v1024 = vunpack.c.l.b16 %v831
        %v1025 = vunpack.c.l.b16 %v832
        %v1026 = vunpack.c.l.b16 %v833
        %v1027 = vunpack.c.l.b16 %v834
        %v1028 = vpack.c.b16 %v1025, %v1024
        %v1029 = vpack.c.b16 %v1027, %v1026
        %1032 = vmatprep.subr.bf16.mxu0 0
        %1033 = vmatpush1.bf16.msra.mxu0 %v1028
        %1034 = vmatprep.subr.bf16.mxu0 0
        %1035 = vmatpush1.bf16.msra.mxu0 %v1029
        %1036 = vmatprep.subr.bf16.mxu0 0
        %1037 = vmatpush1.bf16.msra.mxu0 0
        %1038 = vmatprep.subr.bf16.mxu0 0
        %1039 = vmatpush1.bf16.msra.mxu0 0
        %1040 = vmatprep.subr.bf16.mxu0 0
        %1041 = vmatpush1.bf16.msra.mxu0 0
        %1042 = vmatprep.subr.bf16.mxu0 0
        %1043 = vmatpush1.bf16.msra.mxu0 0
        %1044 = vmatprep.subr.bf16.mxu0 0
        %1045 = vmatpush1.bf16.msra.mxu0 0
        %1046 = vmatprep.subr.bf16.mxu0 0
        %1047 = vmatpush1.bf16.msra.mxu0 0
        %1048 = vmatprep.subr.bf16.mxu0 0
        %1049 = vmatpush1.bf16.msra.mxu0 0
        %1050 = vmatprep.subr.bf16.mxu0 0
        %1051 = vmatpush1.bf16.msra.mxu0 0
        %1052 = vmatprep.subr.bf16.mxu0 0
        %1053 = vmatpush1.bf16.msra.mxu0 0
        %1054 = vmatprep.subr.bf16.mxu0 0
        %1055 = vmatpush1.bf16.msra.mxu0 0
        %1056 = vmatprep.subr.bf16.mxu0 0
        %1057 = vmatpush1.bf16.msra.mxu0 0
        %1058 = vmatprep.subr.bf16.mxu0 0
        %1059 = vmatpush1.bf16.msra.mxu0 0
        %1060 = vmatprep.subr.bf16.mxu0 0
        %1061 = vmatpush1.bf16.msra.mxu0 0
        %1062 = vmatprep.subr.bf16.mxu0 0
        %1063 = vmatpush1.bf16.msra.mxu0 0
        %1064 = vmatprep.mubr.bf16.mxu0 0
        %1065 = vmatmul.mubr.bf16.gmra.mrb[0].mxu0 %v620
        %v1066 = vpop.f32.mrb[0].mxu0
        %v1067 = vadd.f32 %v859, %v1066
        %v1068 = vpop.f32.mrb[0].mxu0
        %v1069 = vpop.f32.mrb[0].mxu0
        %v1070 = vpop.f32.mrb[0].mxu0
        %1071 = vdwg.mxu0
        %s1072 = scalar_lea.vmem %s495, 128
        %v1073 = vld [vmem:[%s1072] sm:$0xf]
        %v1074 = vld [vmem:[%s1072 + $0x4] sm:$0xf]
        %v1075 = vld [vmem:[%s1072 + $0x8] sm:$0xf]
        %v1076 = vld [vmem:[%s1072 + $0xc] sm:$0xf]
        %v1077 = vld [vmem:[%s1072 + $0x10] sm:$0xf]
        %v1078 = vld [vmem:[%s1072 + $0x14] sm:$0xf]
        %v1079 = vld [vmem:[%s1072 + $0x18] sm:$0xf]
        %v1080 = vld [vmem:[%s1072 + $0x1c] sm:$0xf]
        %v1081 = vld [vmem:[%s1072 + $0x20] sm:$0xf]
        %v1082 = vld [vmem:[%s1072 + $0x24] sm:$0xf]
        %v1083 = vld [vmem:[%s1072 + $0x28] sm:$0xf]
        %v1084 = vld [vmem:[%s1072 + $0x2c] sm:$0xf]
        %v1085 = vld [vmem:[%s1072 + $0x30] sm:$0xf]
        %v1086 = vld [vmem:[%s1072 + $0x34] sm:$0xf]
        %v1087 = vld [vmem:[%s1072 + $0x38] sm:$0xf]
        %v1088 = vld [vmem:[%s1072 + $0x3c] sm:$0xf]
        %s1089 = scalar_lea.vmem %s499, 8
        %v1090 = vld [vmem:[%s1089] sm:$0x1]
        %v1091 = vld [vmem:[%s1089 + $0x1] sm:$0x1]
        %v1092 = vld [vmem:[%s1089 + $0x2] sm:$0x1]
        %v1093 = vld [vmem:[%s1089 + $0x3] sm:$0x1]
        %v1098 = vlaneseq
        %v1099 = vshrl.u32 %v1098, 7
        %v1100 = vsub.s32 0, %v1099
        %v1101 = vrot.slane %v1090, %v1100
        %v1102 = vlaneseq
        %v1103 = vshrl.u32 %v1102, 7
        %v1104 = vsub.s32 0, %v1103
        %v1105 = vrot.slane %v1091, %v1104
        %v1106 = vlaneseq
        %v1107 = vshrl.u32 %v1106, 7
        %v1108 = vsub.s32 0, %v1107
        %v1109 = vrot.slane %v1092, %v1108
        %v1110 = vlaneseq
        %v1111 = vshrl.u32 %v1110, 7
        %v1112 = vsub.s32 0, %v1111
        %v1113 = vrot.slane %v1093, %v1112
        %v1122 = vunpack.c.l.b16 %v1073
        %v1123 = vunpack.c.l.b16 %v1074
        %v1124 = vunpack.c.l.b16 %v1075
        %v1125 = vunpack.c.l.b16 %v1076
        %v1126 = vpack.c.b16 %v1123, %v1122
        %v1127 = vpack.c.b16 %v1125, %v1124
        %1130 = vmatprep.subr.bf16.mxu0 0
        %1131 = vmatpush1.bf16.msra.mxu0 %v1126
        %1132 = vmatprep.subr.bf16.mxu0 0
        %1133 = vmatpush1.bf16.msra.mxu0 %v1127
        %1134 = vmatprep.subr.bf16.mxu0 0
        %1135 = vmatpush1.bf16.msra.mxu0 0
        %1136 = vmatprep.subr.bf16.mxu0 0
        %1137 = vmatpush1.bf16.msra.mxu0 0
        %1138 = vmatprep.subr.bf16.mxu0 0
        %1139 = vmatpush1.bf16.msra.mxu0 0
        %1140 = vmatprep.subr.bf16.mxu0 0
        %1141 = vmatpush1.bf16.msra.mxu0 0
        %1142 = vmatprep.subr.bf16.mxu0 0
        %1143 = vmatpush1.bf16.msra.mxu0 0
        %1144 = vmatprep.subr.bf16.mxu0 0
        %1145 = vmatpush1.bf16.msra.mxu0 0
        %1146 = vmatprep.subr.bf16.mxu0 0
        %1147 = vmatpush1.bf16.msra.mxu0 0
        %1148 = vmatprep.subr.bf16.mxu0 0
        %1149 = vmatpush1.bf16.msra.mxu0 0
        %1150 = vmatprep.subr.bf16.mxu0 0
        %1151 = vmatpush1.bf16.msra.mxu0 0
        %1152 = vmatprep.subr.bf16.mxu0 0
        %1153 = vmatpush1.bf16.msra.mxu0 0
        %1154 = vmatprep.subr.bf16.mxu0 0
        %1155 = vmatpush1.bf16.msra.mxu0 0
        %1156 = vmatprep.subr.bf16.mxu0 0
        %1157 = vmatpush1.bf16.msra.mxu0 0
        %1158 = vmatprep.subr.bf16.mxu0 0
        %1159 = vmatpush1.bf16.msra.mxu0 0
        %1160 = vmatprep.subr.bf16.mxu0 0
        %1161 = vmatpush1.bf16.msra.mxu0 0
        %1162 = vmatprep.mubr.bf16.mxu0 0
        %1163 = vmatmul.mubr.bf16.gmra.mrb[0].mxu0 %v620
        %v1164 = vpop.f32.mrb[0].mxu0
        %v1165 = vadd.f32 %v1101, %v1164
        %v1166 = vpop.f32.mrb[0].mxu0
        %v1167 = vpop.f32.mrb[0].mxu0
        %v1168 = vpop.f32.mrb[0].mxu0
        %1169 = vdwg.mxu0
        %v1174 = vunpack.c.l.b16 %v1077
        %v1175 = vunpack.c.l.b16 %v1078
        %v1176 = vunpack.c.l.b16 %v1079
        %v1177 = vunpack.c.l.b16 %v1080
        %v1178 = vpack.c.b16 %v1175, %v1174
        %v1179 = vpack.c.b16 %v1177, %v1176
        %1182 = vmatprep.subr.bf16.mxu0 0
        %1183 = vmatpush1.bf16.msra.mxu0 %v1178
        %1184 = vmatprep.subr.bf16.mxu0 0
        %1185 = vmatpush1.bf16.msra.mxu0 %v1179
        %1186 = vmatprep.subr.bf16.mxu0 0
        %1187 = vmatpush1.bf16.msra.mxu0 0
        %1188 = vmatprep.subr.bf16.mxu0 0
        %1189 = vmatpush1.bf16.msra.mxu0 0
        %1190 = vmatprep.subr.bf16.mxu0 0
        %1191 = vmatpush1.bf16.msra.mxu0 0
        %1192 = vmatprep.subr.bf16.mxu0 0
        %1193 = vmatpush1.bf16.msra.mxu0 0
        %1194 = vmatprep.subr.bf16.mxu0 0
        %1195 = vmatpush1.bf16.msra.mxu0 0
        %1196 = vmatprep.subr.bf16.mxu0 0
        %1197 = vmatpush1.bf16.msra.mxu0 0
        %1198 = vmatprep.subr.bf16.mxu0 0
        %1199 = vmatpush1.bf16.msra.mxu0 0
        %1200 = vmatprep.subr.bf16.mxu0 0
        %1201 = vmatpush1.bf16.msra.mxu0 0
        %1202 = vmatprep.subr.bf16.mxu0 0
        %1203 = vmatpush1.bf16.msra.mxu0 0
        %1204 = vmatprep.subr.bf16.mxu0 0
        %1205 = vmatpush1.bf16.msra.mxu0 0
        %1206 = vmatprep.subr.bf16.mxu0 0
        %1207 = vmatpush1.bf16.msra.mxu0 0
        %1208 = vmatprep.subr.bf16.mxu0 0
        %1209 = vmatpush1.bf16.msra.mxu0 0
        %1210 = vmatprep.subr.bf16.mxu0 0
        %1211 = vmatpush1.bf16.msra.mxu0 0
        %1212 = vmatprep.subr.bf16.mxu0 0
        %1213 = vmatpush1.bf16.msra.mxu0 0
        %1214 = vmatprep.mubr.bf16.mxu0 0
        %1215 = vmatmul.mubr.bf16.gmra.mrb[0].mxu0 %v620
        %v1216 = vpop.f32.mrb[0].mxu0
        %v1217 = vadd.f32 %v1105, %v1216
        %v1218 = vpop.f32.mrb[0].mxu0
        %v1219 = vpop.f32.mrb[0].mxu0
        %v1220 = vpop.f32.mrb[0].mxu0
        %1221 = vdwg.mxu0
        %v1226 = vunpack.c.l.b16 %v1081
        %v1227 = vunpack.c.l.b16 %v1082
        %v1228 = vunpack.c.l.b16 %v1083
        %v1229 = vunpack.c.l.b16 %v1084
        %v1230 = vpack.c.b16 %v1227, %v1226
        %v1231 = vpack.c.b16 %v1229, %v1228
        %1234 = vmatprep.subr.bf16.mxu0 0
        %1235 = vmatpush1.bf16.msra.mxu0 %v1230
        %1236 = vmatprep.subr.bf16.mxu0 0
        %1237 = vmatpush1.bf16.msra.mxu0 %v1231
        %1238 = vmatprep.subr.bf16.mxu0 0
        %1239 = vmatpush1.bf16.msra.mxu0 0
        %1240 = vmatprep.subr.bf16.mxu0 0
        %1241 = vmatpush1.bf16.msra.mxu0 0
        %1242 = vmatprep.subr.bf16.mxu0 0
        %1243 = vmatpush1.bf16.msra.mxu0 0
        %1244 = vmatprep.subr.bf16.mxu0 0
        %1245 = vmatpush1.bf16.msra.mxu0 0
        %1246 = vmatprep.subr.bf16.mxu0 0
        %1247 = vmatpush1.bf16.msra.mxu0 0
        %1248 = vmatprep.subr.bf16.mxu0 0
        %1249 = vmatpush1.bf16.msra.mxu0 0
        %1250 = vmatprep.subr.bf16.mxu0 0
        %1251 = vmatpush1.bf16.msra.mxu0 0
        %1252 = vmatprep.subr.bf16.mxu0 0
        %1253 = vmatpush1.bf16.msra.mxu0 0
        %1254 = vmatprep.subr.bf16.mxu0 0
        %1255 = vmatpush1.bf16.msra.mxu0 0
        %1256 = vmatprep.subr.bf16.mxu0 0
        %1257 = vmatpush1.bf16.msra.mxu0 0
        %1258 = vmatprep.subr.bf16.mxu0 0
        %1259 = vmatpush1.bf16.msra.mxu0 0
        %1260 = vmatprep.subr.bf16.mxu0 0
        %1261 = vmatpush1.bf16.msra.mxu0 0
        %1262 = vmatprep.subr.bf16.mxu0 0
        %1263 = vmatpush1.bf16.msra.mxu0 0
        %1264 = vmatprep.subr.bf16.mxu0 0
        %1265 = vmatpush1.bf16.msra.mxu0 0
        %1266 = vmatprep.mubr.bf16.mxu0 0
        %1267 = vmatmul.mubr.bf16.gmra.mrb[0].mxu0 %v620
        %v1268 = vpop.f32.mrb[0].mxu0
        %v1269 = vadd.f32 %v1109, %v1268
        %v1270 = vpop.f32.mrb[0].mxu0
        %v1271 = vpop.f32.mrb[0].mxu0
        %v1272 = vpop.f32.mrb[0].mxu0
        %1273 = vdwg.mxu0
        %v1278 = vunpack.c.l.b16 %v1085
        %v1279 = vunpack.c.l.b16 %v1086
        %v1280 = vunpack.c.l.b16 %v1087
        %v1281 = vunpack.c.l.b16 %v1088
        %v1282 = vpack.c.b16 %v1279, %v1278
        %v1283 = vpack.c.b16 %v1281, %v1280
        %1286 = vmatprep.subr.bf16.mxu0 0
        %1287 = vmatpush1.bf16.msra.mxu0 %v1282
        %1288 = vmatprep.subr.bf16.mxu0 0
        %1289 = vmatpush1.bf16.msra.mxu0 %v1283
        %1290 = vmatprep.subr.bf16.mxu0 0
        %1291 = vmatpush1.bf16.msra.mxu0 0
        %1292 = vmatprep.subr.bf16.mxu0 0
        %1293 = vmatpush1.bf16.msra.mxu0 0
        %1294 = vmatprep.subr.bf16.mxu0 0
        %1295 = vmatpush1.bf16.msra.mxu0 0
        %1296 = vmatprep.subr.bf16.mxu0 0
        %1297 = vmatpush1.bf16.msra.mxu0 0
        %1298 = vmatprep.subr.bf16.mxu0 0
        %1299 = vmatpush1.bf16.msra.mxu0 0
        %1300 = vmatprep.subr.bf16.mxu0 0
        %1301 = vmatpush1.bf16.msra.mxu0 0
        %1302 = vmatprep.subr.bf16.mxu0 0
        %1303 = vmatpush1.bf16.msra.mxu0 0
        %1304 = vmatprep.subr.bf16.mxu0 0
        %1305 = vmatpush1.bf16.msra.mxu0 0
        %1306 = vmatprep.subr.bf16.mxu0 0
        %1307 = vmatpush1.bf16.msra.mxu0 0
        %1308 = vmatprep.subr.bf16.mxu0 0
        %1309 = vmatpush1.bf16.msra.mxu0 0
        %1310 = vmatprep.subr.bf16.mxu0 0
        %1311 = vmatpush1.bf16.msra.mxu0 0
        %1312 = vmatprep.subr.bf16.mxu0 0
        %1313 = vmatpush1.bf16.msra.mxu0 0
        %1314 = vmatprep.subr.bf16.mxu0 0
        %1315 = vmatpush1.bf16.msra.mxu0 0
        %1316 = vmatprep.subr.bf16.mxu0 0
        %1317 = vmatpush1.bf16.msra.mxu0 0
        %1318 = vmatprep.mubr.bf16.mxu0 0
        %1319 = vmatmul.mubr.bf16.gmra.mrb[0].mxu0 %v620
        %v1320 = vpop.f32.mrb[0].mxu0
        %v1321 = vadd.f32 %v1113, %v1320
        %v1322 = vpop.f32.mrb[0].mxu0
        %v1323 = vpop.f32.mrb[0].mxu0
        %v1324 = vpop.f32.mrb[0].mxu0
        %1325 = vdwg.mxu0
        %v1326 = vpack.c.bf16 %v657, %v657
        %v1327 = vpack.c.bf16 %v709, %v709
        %v1328 = vpack.c.bf16 %v761, %v761
        %v1329 = vpack.c.bf16 %v813, %v813
        %v1330 = vpack.c.bf16 %v911, %v911
        %v1331 = vpack.c.bf16 %v963, %v963
        %v1332 = vpack.c.bf16 %v1015, %v1015
        %v1333 = vpack.c.bf16 %v1067, %v1067
        %vm1334 = vcmask 64512
        %v1336 = vsel %vm1334, %v1326, 0
        %v1339 = vsel %vm1334, %v1330, 0
        %1341 = vmatprep.subr.bf16.mxu0 0
        %1342 = vmatpush1.bf16.xpose.msra.mxu0 %v1339
        %1343 = vmatprep.subr.bf16.mxu0 0
        %1344 = vmatpush1.bf16.xpose.msra.mxu0 0
        %1345 = vmatprep.subr.bf16.mxu0 0
        %1346 = vmatpush1.bf16.xpose.msra.mxu0 0
        %1347 = vmatprep.subr.bf16.mxu0 0
        %1348 = vmatpush1.bf16.xpose.msra.mxu0 0
        %1349 = vmatprep.subr.bf16.mxu0 0
        %1350 = vmatpush1.bf16.xpose.msra.mxu0 0
        %1351 = vmatprep.subr.bf16.mxu0 0
        %1352 = vmatpush1.bf16.xpose.msra.mxu0 0
        %1353 = vmatprep.subr.bf16.mxu0 0
        %1354 = vmatpush1.bf16.xpose.msra.mxu0 0
        %1355 = vmatprep.subr.bf16.mxu0 0
        %1356 = vmatpush1.bf16.xpose.msra.mxu0 0
        %1357 = vmatprep.subr.bf16.mxu0 0
        %1358 = vmatpush1.bf16.xpose.msra.mxu0 0
        %1359 = vmatprep.subr.bf16.mxu0 0
        %1360 = vmatpush1.bf16.xpose.msra.mxu0 0
        %1361 = vmatprep.subr.bf16.mxu0 0
        %1362 = vmatpush1.bf16.xpose.msra.mxu0 0
        %1363 = vmatprep.subr.bf16.mxu0 0
        %1364 = vmatpush1.bf16.xpose.msra.mxu0 0
        %1365 = vmatprep.subr.bf16.mxu0 0
        %1366 = vmatpush1.bf16.xpose.msra.mxu0 0
        %1367 = vmatprep.subr.bf16.mxu0 0
        %1368 = vmatpush1.bf16.xpose.msra.mxu0 0
        %1369 = vmatprep.subr.bf16.mxu0 0
        %1370 = vmatpush1.bf16.xpose.msra.mxu0 0
        %1371 = vmatprep.subr.bf16.mxu0 0
        %1372 = vmatpush1.bf16.xpose.msra.mxu0 0
        %1373 = vmatprep.mubr.bf16.mxu0 0
        %1374 = vmatmul.mubr.bf16.gmra.mrb[0].mxu0 %v1336
        %v1375 = vpop.f32.mrb[0].mxu0
        %v1376 = vadd.f32 0.0, %v1375
        %v1377 = vpop.f32.mrb[0].mxu0
        %v1378 = vpop.f32.mrb[0].mxu0
        %v1379 = vpop.f32.mrb[0].mxu0
        %1380 = vdwg.mxu0
        %v1382 = vsel %vm1334, %v1327, 0
        %v1385 = vsel %vm1334, %v1331, 0
        %1387 = vmatprep.subr.bf16.mxu0 0
        %1388 = vmatpush1.bf16.xpose.msra.mxu0 %v1385
        %1389 = vmatprep.subr.bf16.mxu0 0
        %1390 = vmatpush1.bf16.xpose.msra.mxu0 0
        %1391 = vmatprep.subr.bf16.mxu0 0
        %1392 = vmatpush1.bf16.xpose.msra.mxu0 0
        %1393 = vmatprep.subr.bf16.mxu0 0
        %1394 = vmatpush1.bf16.xpose.msra.mxu0 0
        %1395 = vmatprep.subr.bf16.mxu0 0
        %1396 = vmatpush1.bf16.xpose.msra.mxu0 0
        %1397 = vmatprep.subr.bf16.mxu0 0
        %1398 = vmatpush1.bf16.xpose.msra.mxu0 0
        %1399 = vmatprep.subr.bf16.mxu0 0
        %1400 = vmatpush1.bf16.xpose.msra.mxu0 0
        %1401 = vmatprep.subr.bf16.mxu0 0
        %1402 = vmatpush1.bf16.xpose.msra.mxu0 0
        %1403 = vmatprep.subr.bf16.mxu0 0
        %1404 = vmatpush1.bf16.xpose.msra.mxu0 0
        %1405 = vmatprep.subr.bf16.mxu0 0
        %1406 = vmatpush1.bf16.xpose.msra.mxu0 0
        %1407 = vmatprep.subr.bf16.mxu0 0
        %1408 = vmatpush1.bf16.xpose.msra.mxu0 0
        %1409 = vmatprep.subr.bf16.mxu0 0
        %1410 = vmatpush1.bf16.xpose.msra.mxu0 0
        %1411 = vmatprep.subr.bf16.mxu0 0
        %1412 = vmatpush1.bf16.xpose.msra.mxu0 0
        %1413 = vmatprep.subr.bf16.mxu0 0
        %1414 = vmatpush1.bf16.xpose.msra.mxu0 0
        %1415 = vmatprep.subr.bf16.mxu0 0
        %1416 = vmatpush1.bf16.xpose.msra.mxu0 0
        %1417 = vmatprep.subr.bf16.mxu0 0
        %1418 = vmatpush1.bf16.xpose.msra.mxu0 0
        %1419 = vmatprep.mubr.bf16.mxu0 0
        %1420 = vmatmul.mubr.bf16.gmra.mrb[0].mxu0 %v1382
        %v1421 = vpop.f32.mrb[0].mxu0
        %v1422 = vadd.f32 0.0, %v1421
        %v1423 = vpop.f32.mrb[0].mxu0
        %v1424 = vpop.f32.mrb[0].mxu0
        %v1425 = vpop.f32.mrb[0].mxu0
        %1426 = vdwg.mxu0
        %v1428 = vsel %vm1334, %v1328, 0
        %v1431 = vsel %vm1334, %v1332, 0
        %1433 = vmatprep.subr.bf16.mxu0 0
        %1434 = vmatpush1.bf16.xpose.msra.mxu0 %v1431
        %1435 = vmatprep.subr.bf16.mxu0 0
        %1436 = vmatpush1.bf16.xpose.msra.mxu0 0
        %1437 = vmatprep.subr.bf16.mxu0 0
        %1438 = vmatpush1.bf16.xpose.msra.mxu0 0
        %1439 = vmatprep.subr.bf16.mxu0 0
        %1440 = vmatpush1.bf16.xpose.msra.mxu0 0
        %1441 = vmatprep.subr.bf16.mxu0 0
        %1442 = vmatpush1.bf16.xpose.msra.mxu0 0
        %1443 = vmatprep.subr.bf16.mxu0 0
        %1444 = vmatpush1.bf16.xpose.msra.mxu0 0
        %1445 = vmatprep.subr.bf16.mxu0 0
        %1446 = vmatpush1.bf16.xpose.msra.mxu0 0
        %1447 = vmatprep.subr.bf16.mxu0 0
        %1448 = vmatpush1.bf16.xpose.msra.mxu0 0
        %1449 = vmatprep.subr.bf16.mxu0 0
        %1450 = vmatpush1.bf16.xpose.msra.mxu0 0
        %1451 = vmatprep.subr.bf16.mxu0 0
        %1452 = vmatpush1.bf16.xpose.msra.mxu0 0
        %1453 = vmatprep.subr.bf16.mxu0 0
        %1454 = vmatpush1.bf16.xpose.msra.mxu0 0
        %1455 = vmatprep.subr.bf16.mxu0 0
        %1456 = vmatpush1.bf16.xpose.msra.mxu0 0
        %1457 = vmatprep.subr.bf16.mxu0 0
        %1458 = vmatpush1.bf16.xpose.msra.mxu0 0
        %1459 = vmatprep.subr.bf16.mxu0 0
        %1460 = vmatpush1.bf16.xpose.msra.mxu0 0
        %1461 = vmatprep.subr.bf16.mxu0 0
        %1462 = vmatpush1.bf16.xpose.msra.mxu0 0
        %1463 = vmatprep.subr.bf16.mxu0 0
        %1464 = vmatpush1.bf16.xpose.msra.mxu0 0
        %1465 = vmatprep.mubr.bf16.mxu0 0
        %1466 = vmatmul.mubr.bf16.gmra.mrb[0].mxu0 %v1428
        %v1467 = vpop.f32.mrb[0].mxu0
        %v1468 = vadd.f32 0.0, %v1467
        %v1469 = vpop.f32.mrb[0].mxu0
        %v1470 = vpop.f32.mrb[0].mxu0
        %v1471 = vpop.f32.mrb[0].mxu0
        %1472 = vdwg.mxu0
        %v1474 = vsel %vm1334, %v1329, 0
        %v1477 = vsel %vm1334, %v1333, 0
        %1479 = vmatprep.subr.bf16.mxu0 0
        %1480 = vmatpush1.bf16.xpose.msra.mxu0 %v1477
        %1481 = vmatprep.subr.bf16.mxu0 0
        %1482 = vmatpush1.bf16.xpose.msra.mxu0 0
        %1483 = vmatprep.subr.bf16.mxu0 0
        %1484 = vmatpush1.bf16.xpose.msra.mxu0 0
        %1485 = vmatprep.subr.bf16.mxu0 0
        %1486 = vmatpush1.bf16.xpose.msra.mxu0 0
        %1487 = vmatprep.subr.bf16.mxu0 0
        %1488 = vmatpush1.bf16.xpose.msra.mxu0 0
        %1489 = vmatprep.subr.bf16.mxu0 0
        %1490 = vmatpush1.bf16.xpose.msra.mxu0 0
        %1491 = vmatprep.subr.bf16.mxu0 0
        %1492 = vmatpush1.bf16.xpose.msra.mxu0 0
        %1493 = vmatprep.subr.bf16.mxu0 0
        %1494 = vmatpush1.bf16.xpose.msra.mxu0 0
        %1495 = vmatprep.subr.bf16.mxu0 0
        %1496 = vmatpush1.bf16.xpose.msra.mxu0 0
        %1497 = vmatprep.subr.bf16.mxu0 0
        %1498 = vmatpush1.bf16.xpose.msra.mxu0 0
        %1499 = vmatprep.subr.bf16.mxu0 0
        %1500 = vmatpush1.bf16.xpose.msra.mxu0 0
        %1501 = vmatprep.subr.bf16.mxu0 0
        %1502 = vmatpush1.bf16.xpose.msra.mxu0 0
        %1503 = vmatprep.subr.bf16.mxu0 0
        %1504 = vmatpush1.bf16.xpose.msra.mxu0 0
        %1505 = vmatprep.subr.bf16.mxu0 0
        %1506 = vmatpush1.bf16.xpose.msra.mxu0 0
        %1507 = vmatprep.subr.bf16.mxu0 0
        %1508 = vmatpush1.bf16.xpose.msra.mxu0 0
        %1509 = vmatprep.subr.bf16.mxu0 0
        %1510 = vmatpush1.bf16.xpose.msra.mxu0 0
        %1511 = vmatprep.mubr.bf16.mxu0 0
        %1512 = vmatmul.mubr.bf16.gmra.mrb[0].mxu0 %v1474
        %v1513 = vpop.f32.mrb[0].mxu0
        %v1514 = vadd.f32 0.0, %v1513
        %v1515 = vpop.f32.mrb[0].mxu0
        %v1516 = vpop.f32.mrb[0].mxu0
        %v1517 = vpop.f32.mrb[0].mxu0
        %1518 = vdwg.mxu0
        %v1519 = vmul.f32 %v1376, 0.35355338
        %v1520 = vmul.f32 %v1422, 0.35355338
        %v1521 = vmul.f32 %v1468, 0.35355338
        %v1522 = vmul.f32 %v1514, 0.35355338
        %v1523 = vlaneseq
        %v1524 = vshrl.u32 %v1523, 7
        %v1525 = vlaneseq
        %v1526 = vand.u32 %v1525, 127
        %vm1527 = vcmp.le.s32.totalorder %v1526, %v1524
        %v1528 = vsel %vm1527, 1, 0
        %vm1529 = vcmp.eq.s32.totalorder %v1528, 1
        %v1530 = vsel %vm1529, %v1519, -1e+30
        %v1531 = vsel %vm1529, %v1520, -1e+30
        %v1532 = vsel %vm1529, %v1521, -1e+30
        %v1533 = vsel %vm1529, %v1522, -1e+30
        %v1534 = vsel %vm1334, %v1530, -inf
        %1535 = vmax.xlane.f32.xlu0 %v1534
        %v1536 = vpop.xlane.xlu0 %1535
        %v1537 = vsel %vm1334, %v1531, -inf
        %1538 = vmax.xlane.f32.xlu0 %v1537
        %v1539 = vpop.xlane.xlu0 %1538
        %v1540 = vsel %vm1334, %v1532, -inf
        %1541 = vmax.xlane.f32.xlu0 %v1540
        %v1542 = vpop.xlane.xlu0 %1541
        %v1543 = vsel %vm1334, %v1533, -inf
        %1544 = vmax.xlane.f32.xlu0 %v1543
        %v1545 = vpop.xlane.xlu0 %1544
        %v1546 = vsub.f32 %v1530, %v1536
        %v1547 = vsub.f32 %v1531, %v1539
        %v1548 = vsub.f32 %v1532, %v1542
        %v1549 = vsub.f32 %v1533, %v1545
        %v1550 = vmul.f32 %v1546, 1.442695
        %v1551 = vpow.pop %v1550
        %v1552 = vmul.f32 %v1547, 1.442695
        %v1553 = vpow.pop %v1552
        %v1554 = vmul.f32 %v1548, 1.442695
        %v1555 = vpow.pop %v1554
        %v1556 = vmul.f32 %v1549, 1.442695
        %v1557 = vpow.pop %v1556
        %v1558 = vsel %vm1334, %v1551, 0.0
        %1559 = vadd.xlane.f32.xlu0 %v1558
        %v1560 = vpop.xlane.xlu0 %1559
        %v1561 = vsel %vm1334, %v1553, 0.0
        %1562 = vadd.xlane.f32.xlu0 %v1561
        %v1563 = vpop.xlane.xlu0 %1562
        %v1564 = vsel %vm1334, %v1555, 0.0
        %1565 = vadd.xlane.f32.xlu0 %v1564
        %v1566 = vpop.xlane.xlu0 %1565
        %v1567 = vsel %vm1334, %v1557, 0.0
        %1568 = vadd.xlane.f32.xlu0 %v1567
        %v1569 = vpop.xlane.xlu0 %1568
        %v1570 = vrcp.pop %v1560
        %v1571 = vmul.f32 %v1551, %v1570
        %v1572 = vrcp.pop %v1563
        %v1573 = vmul.f32 %v1553, %v1572
        %v1574 = vrcp.pop %v1566
        %v1575 = vmul.f32 %v1555, %v1574
        %v1576 = vrcp.pop %v1569
        %v1577 = vmul.f32 %v1557, %v1576
        %v1578 = vpack.c.bf16 %v1571, %v1571
        %v1579 = vpack.c.bf16 %v1573, %v1573
        %v1580 = vpack.c.bf16 %v1575, %v1575
        %v1581 = vpack.c.bf16 %v1577, %v1577
        %v1582 = vpack.c.bf16 %v1165, %v1165
        %v1583 = vpack.c.bf16 %v1217, %v1217
        %v1584 = vpack.c.bf16 %v1269, %v1269
        %v1585 = vpack.c.bf16 %v1321, %v1321
        %v1587 = vsel %vm1334, %v1578, 0
        %vm1589 = vcmask 1043456
        %v1591 = vsel %vm1589, %v1582, 0
        %1593 = vmatprep.subr.bf16.mxu0 0
        %1594 = vmatpush1.bf16.msra.mxu0 %v1591
        %1595 = vmatprep.subr.bf16.mxu0 0
        %1596 = vmatpush1.bf16.msra.mxu0 0
        %1597 = vmatprep.subr.bf16.mxu0 0
        %1598 = vmatpush1.bf16.msra.mxu0 0
        %1599 = vmatprep.subr.bf16.mxu0 0
        %1600 = vmatpush1.bf16.msra.mxu0 0
        %1601 = vmatprep.subr.bf16.mxu0 0
        %1602 = vmatpush1.bf16.msra.mxu0 0
        %1603 = vmatprep.subr.bf16.mxu0 0
        %1604 = vmatpush1.bf16.msra.mxu0 0
        %1605 = vmatprep.subr.bf16.mxu0 0
        %1606 = vmatpush1.bf16.msra.mxu0 0
        %1607 = vmatprep.subr.bf16.mxu0 0
        %1608 = vmatpush1.bf16.msra.mxu0 0
        %1609 = vmatprep.subr.bf16.mxu0 0
        %1610 = vmatpush1.bf16.msra.mxu0 0
        %1611 = vmatprep.subr.bf16.mxu0 0
        %1612 = vmatpush1.bf16.msra.mxu0 0
        %1613 = vmatprep.subr.bf16.mxu0 0
        %1614 = vmatpush1.bf16.msra.mxu0 0
        %1615 = vmatprep.subr.bf16.mxu0 0
        %1616 = vmatpush1.bf16.msra.mxu0 0
        %1617 = vmatprep.subr.bf16.mxu0 0
        %1618 = vmatpush1.bf16.msra.mxu0 0
        %1619 = vmatprep.subr.bf16.mxu0 0
        %1620 = vmatpush1.bf16.msra.mxu0 0
        %1621 = vmatprep.subr.bf16.mxu0 0
        %1622 = vmatpush1.bf16.msra.mxu0 0
        %1623 = vmatprep.subr.bf16.mxu0 0
        %1624 = vmatpush1.bf16.msra.mxu0 0
        %1625 = vmatprep.mubr.bf16.mxu0 0
        %1626 = vmatmul.mubr.bf16.gmra.mrb[0].mxu0 %v1587
        %v1627 = vpop.f32.mrb[0].mxu0
        %v1628 = vadd.f32 0.0, %v1627
        %v1629 = vpop.f32.mrb[0].mxu0
        %v1630 = vpop.f32.mrb[0].mxu0
        %v1631 = vpop.f32.mrb[0].mxu0
        %1632 = vdwg.mxu0
        %v1634 = vsel %vm1334, %v1579, 0
        %v1637 = vsel %vm1589, %v1583, 0
        %1639 = vmatprep.subr.bf16.mxu0 0
        %1640 = vmatpush1.bf16.msra.mxu0 %v1637
        %1641 = vmatprep.subr.bf16.mxu0 0
        %1642 = vmatpush1.bf16.msra.mxu0 0
        %1643 = vmatprep.subr.bf16.mxu0 0
        %1644 = vmatpush1.bf16.msra.mxu0 0
        %1645 = vmatprep.subr.bf16.mxu0 0
        %1646 = vmatpush1.bf16.msra.mxu0 0
        %1647 = vmatprep.subr.bf16.mxu0 0
        %1648 = vmatpush1.bf16.msra.mxu0 0
        %1649 = vmatprep.subr.bf16.mxu0 0
        %1650 = vmatpush1.bf16.msra.mxu0 0
        %1651 = vmatprep.subr.bf16.mxu0 0
        %1652 = vmatpush1.bf16.msra.mxu0 0
        %1653 = vmatprep.subr.bf16.mxu0 0
        %1654 = vmatpush1.bf16.msra.mxu0 0
        %1655 = vmatprep.subr.bf16.mxu0 0
        %1656 = vmatpush1.bf16.msra.mxu0 0
        %1657 = vmatprep.subr.bf16.mxu0 0
        %1658 = vmatpush1.bf16.msra.mxu0 0
        %1659 = vmatprep.subr.bf16.mxu0 0
        %1660 = vmatpush1.bf16.msra.mxu0 0
        %1661 = vmatprep.subr.bf16.mxu0 0
        %1662 = vmatpush1.bf16.msra.mxu0 0
        %1663 = vmatprep.subr.bf16.mxu0 0
        %1664 = vmatpush1.bf16.msra.mxu0 0
        %1665 = vmatprep.subr.bf16.mxu0 0
        %1666 = vmatpush1.bf16.msra.mxu0 0
        %1667 = vmatprep.subr.bf16.mxu0 0
        %1668 = vmatpush1.bf16.msra.mxu0 0
        %1669 = vmatprep.subr.bf16.mxu0 0
        %1670 = vmatpush1.bf16.msra.mxu0 0
        %1671 = vmatprep.mubr.bf16.mxu0 0
        %1672 = vmatmul.mubr.bf16.gmra.mrb[0].mxu0 %v1634
        %v1673 = vpop.f32.mrb[0].mxu0
        %v1674 = vadd.f32 0.0, %v1673
        %v1675 = vpop.f32.mrb[0].mxu0
        %v1676 = vpop.f32.mrb[0].mxu0
        %v1677 = vpop.f32.mrb[0].mxu0
        %1678 = vdwg.mxu0
        %v1680 = vsel %vm1334, %v1580, 0
        %v1683 = vsel %vm1589, %v1584, 0
        %1685 = vmatprep.subr.bf16.mxu0 0
        %1686 = vmatpush1.bf16.msra.mxu0 %v1683
        %1687 = vmatprep.subr.bf16.mxu0 0
        %1688 = vmatpush1.bf16.msra.mxu0 0
        %1689 = vmatprep.subr.bf16.mxu0 0
        %1690 = vmatpush1.bf16.msra.mxu0 0
        %1691 = vmatprep.subr.bf16.mxu0 0
        %1692 = vmatpush1.bf16.msra.mxu0 0
        %1693 = vmatprep.subr.bf16.mxu0 0
        %1694 = vmatpush1.bf16.msra.mxu0 0
        %1695 = vmatprep.subr.bf16.mxu0 0
        %1696 = vmatpush1.bf16.msra.mxu0 0
        %1697 = vmatprep.subr.bf16.mxu0 0
        %1698 = vmatpush1.bf16.msra.mxu0 0
        %1699 = vmatprep.subr.bf16.mxu0 0
        %1700 = vmatpush1.bf16.msra.mxu0 0
        %1701 = vmatprep.subr.bf16.mxu0 0
        %1702 = vmatpush1.bf16.msra.mxu0 0
        %1703 = vmatprep.subr.bf16.mxu0 0
        %1704 = vmatpush1.bf16.msra.mxu0 0
        %1705 = vmatprep.subr.bf16.mxu0 0
        %1706 = vmatpush1.bf16.msra.mxu0 0
        %1707 = vmatprep.subr.bf16.mxu0 0
        %1708 = vmatpush1.bf16.msra.mxu0 0
        %1709 = vmatprep.subr.bf16.mxu0 0
        %1710 = vmatpush1.bf16.msra.mxu0 0
        %1711 = vmatprep.subr.bf16.mxu0 0
        %1712 = vmatpush1.bf16.msra.mxu0 0
        %1713 = vmatprep.subr.bf16.mxu0 0
        %1714 = vmatpush1.bf16.msra.mxu0 0
        %1715 = vmatprep.subr.bf16.mxu0 0
        %1716 = vmatpush1.bf16.msra.mxu0 0
        %1717 = vmatprep.mubr.bf16.mxu0 0
        %1718 = vmatmul.mubr.bf16.gmra.mrb[0].mxu0 %v1680
        %v1719 = vpop.f32.mrb[0].mxu0
        %v1720 = vadd.f32 0.0, %v1719
        %v1721 = vpop.f32.mrb[0].mxu0
        %v1722 = vpop.f32.mrb[0].mxu0
        %v1723 = vpop.f32.mrb[0].mxu0
        %1724 = vdwg.mxu0
        %v1726 = vsel %vm1334, %v1581, 0
        %v1729 = vsel %vm1589, %v1585, 0
        %1731 = vmatprep.subr.bf16.mxu0 0
        %1732 = vmatpush1.bf16.msra.mxu0 %v1729
        %1733 = vmatprep.subr.bf16.mxu0 0
        %1734 = vmatpush1.bf16.msra.mxu0 0
        %1735 = vmatprep.subr.bf16.mxu0 0
        %1736 = vmatpush1.bf16.msra.mxu0 0
        %1737 = vmatprep.subr.bf16.mxu0 0
        %1738 = vmatpush1.bf16.msra.mxu0 0
        %1739 = vmatprep.subr.bf16.mxu0 0
        %1740 = vmatpush1.bf16.msra.mxu0 0
        %1741 = vmatprep.subr.bf16.mxu0 0
        %1742 = vmatpush1.bf16.msra.mxu0 0
        %1743 = vmatprep.subr.bf16.mxu0 0
        %1744 = vmatpush1.bf16.msra.mxu0 0
        %1745 = vmatprep.subr.bf16.mxu0 0
        %1746 = vmatpush1.bf16.msra.mxu0 0
        %1747 = vmatprep.subr.bf16.mxu0 0
        %1748 = vmatpush1.bf16.msra.mxu0 0
        %1749 = vmatprep.subr.bf16.mxu0 0
        %1750 = vmatpush1.bf16.msra.mxu0 0
        %1751 = vmatprep.subr.bf16.mxu0 0
        %1752 = vmatpush1.bf16.msra.mxu0 0
        %1753 = vmatprep.subr.bf16.mxu0 0
        %1754 = vmatpush1.bf16.msra.mxu0 0
        %1755 = vmatprep.subr.bf16.mxu0 0
        %1756 = vmatpush1.bf16.msra.mxu0 0
        %1757 = vmatprep.subr.bf16.mxu0 0
        %1758 = vmatpush1.bf16.msra.mxu0 0
        %1759 = vmatprep.subr.bf16.mxu0 0
        %1760 = vmatpush1.bf16.msra.mxu0 0
        %1761 = vmatprep.subr.bf16.mxu0 0
        %1762 = vmatpush1.bf16.msra.mxu0 0
        %1763 = vmatprep.mubr.bf16.mxu0 0
        %1764 = vmatmul.mubr.bf16.gmra.mrb[0].mxu0 %v1726
        %v1765 = vpop.f32.mrb[0].mxu0
        %v1766 = vadd.f32 0.0, %v1765
        %v1767 = vpop.f32.mrb[0].mxu0
        %v1768 = vpop.f32.mrb[0].mxu0
        %v1769 = vpop.f32.mrb[0].mxu0
        %1770 = vdwg.mxu0
        %v1771 = vpack.c.bf16 %v1628, %v1628
        %v1772 = vpack.c.bf16 %v1674, %v1674
        %v1773 = vpack.c.bf16 %v1720, %v1720
        %v1774 = vpack.c.bf16 %v1766, %v1766
        %v1775 = vld [vmem:[%s504] sm:$0xf]
        %v1776 = vld [vmem:[%s504 + $0x4] sm:$0xf]
        %v1777 = vld [vmem:[%s504 + $0x8] sm:$0xf]
        %v1778 = vld [vmem:[%s504 + $0xc] sm:$0xf]
        %v1780 = vsel %vm1334, %v1771, 0
        %v1783 = vsel %vm1589, %v1775, 0
        %1785 = vmatprep.subr.bf16.mxu0 0
        %1786 = vmatpush1.bf16.msra.mxu0 %v1783
        %1787 = vmatprep.subr.bf16.mxu0 0
        %1788 = vmatpush1.bf16.msra.mxu0 0
        %1789 = vmatprep.subr.bf16.mxu0 0
        %1790 = vmatpush1.bf16.msra.mxu0 0
        %1791 = vmatprep.subr.bf16.mxu0 0
        %1792 = vmatpush1.bf16.msra.mxu0 0
        %1793 = vmatprep.subr.bf16.mxu0 0
        %1794 = vmatpush1.bf16.msra.mxu0 0
        %1795 = vmatprep.subr.bf16.mxu0 0
        %1796 = vmatpush1.bf16.msra.mxu0 0
        %1797 = vmatprep.subr.bf16.mxu0 0
        %1798 = vmatpush1.bf16.msra.mxu0 0
        %1799 = vmatprep.subr.bf16.mxu0 0
        %1800 = vmatpush1.bf16.msra.mxu0 0
        %1801 = vmatprep.subr.bf16.mxu0 0
        %1802 = vmatpush1.bf16.msra.mxu0 0
        %1803 = vmatprep.subr.bf16.mxu0 0
        %1804 = vmatpush1.bf16.msra.mxu0 0
        %1805 = vmatprep.subr.bf16.mxu0 0
        %1806 = vmatpush1.bf16.msra.mxu0 0
        %1807 = vmatprep.subr.bf16.mxu0 0
        %1808 = vmatpush1.bf16.msra.mxu0 0
        %1809 = vmatprep.subr.bf16.mxu0 0
        %1810 = vmatpush1.bf16.msra.mxu0 0
        %1811 = vmatprep.subr.bf16.mxu0 0
        %1812 = vmatpush1.bf16.msra.mxu0 0
        %1813 = vmatprep.subr.bf16.mxu0 0
        %1814 = vmatpush1.bf16.msra.mxu0 0
        %1815 = vmatprep.subr.bf16.mxu0 0
        %1816 = vmatpush1.bf16.msra.mxu0 0
        %1817 = vmatprep.mubr.bf16.mxu0 0
        %1818 = vmatmul.mubr.bf16.gmra.mrb[0].mxu0 %v1780
        %v1819 = vpop.f32.mrb[0].mxu0
        %v1820 = vadd.f32 0.0, %v1819
        %v1821 = vpop.f32.mrb[0].mxu0
        %v1822 = vpop.f32.mrb[0].mxu0
        %v1823 = vpop.f32.mrb[0].mxu0
        %1824 = vdwg.mxu0
        %v1826 = vsel %vm1334, %v1772, 0
        %v1829 = vsel %vm1589, %v1776, 0
        %1831 = vmatprep.subr.bf16.mxu0 0
        %1832 = vmatpush1.bf16.msra.mxu0 %v1829
        %1833 = vmatprep.subr.bf16.mxu0 0
        %1834 = vmatpush1.bf16.msra.mxu0 0
        %1835 = vmatprep.subr.bf16.mxu0 0
        %1836 = vmatpush1.bf16.msra.mxu0 0
        %1837 = vmatprep.subr.bf16.mxu0 0
        %1838 = vmatpush1.bf16.msra.mxu0 0
        %1839 = vmatprep.subr.bf16.mxu0 0
        %1840 = vmatpush1.bf16.msra.mxu0 0
        %1841 = vmatprep.subr.bf16.mxu0 0
        %1842 = vmatpush1.bf16.msra.mxu0 0
        %1843 = vmatprep.subr.bf16.mxu0 0
        %1844 = vmatpush1.bf16.msra.mxu0 0
        %1845 = vmatprep.subr.bf16.mxu0 0
        %1846 = vmatpush1.bf16.msra.mxu0 0
        %1847 = vmatprep.subr.bf16.mxu0 0
        %1848 = vmatpush1.bf16.msra.mxu0 0
        %1849 = vmatprep.subr.bf16.mxu0 0
        %1850 = vmatpush1.bf16.msra.mxu0 0
        %1851 = vmatprep.subr.bf16.mxu0 0
        %1852 = vmatpush1.bf16.msra.mxu0 0
        %1853 = vmatprep.subr.bf16.mxu0 0
        %1854 = vmatpush1.bf16.msra.mxu0 0
        %1855 = vmatprep.subr.bf16.mxu0 0
        %1856 = vmatpush1.bf16.msra.mxu0 0
        %1857 = vmatprep.subr.bf16.mxu0 0
        %1858 = vmatpush1.bf16.msra.mxu0 0
        %1859 = vmatprep.subr.bf16.mxu0 0
        %1860 = vmatpush1.bf16.msra.mxu0 0
        %1861 = vmatprep.subr.bf16.mxu0 0
        %1862 = vmatpush1.bf16.msra.mxu0 0
        %1863 = vmatprep.mubr.bf16.mxu0 0
        %1864 = vmatmul.mubr.bf16.gmra.mrb[0].mxu0 %v1826
        %v1865 = vpop.f32.mrb[0].mxu0
        %v1866 = vadd.f32 0.0, %v1865
        %v1867 = vpop.f32.mrb[0].mxu0
        %v1868 = vpop.f32.mrb[0].mxu0
        %v1869 = vpop.f32.mrb[0].mxu0
        %1870 = vdwg.mxu0
        %v1872 = vsel %vm1334, %v1773, 0
        %v1875 = vsel %vm1589, %v1777, 0
        %1877 = vmatprep.subr.bf16.mxu0 0
        %1878 = vmatpush1.bf16.msra.mxu0 %v1875
        %1879 = vmatprep.subr.bf16.mxu0 0
        %1880 = vmatpush1.bf16.msra.mxu0 0
        %1881 = vmatprep.subr.bf16.mxu0 0
        %1882 = vmatpush1.bf16.msra.mxu0 0
        %1883 = vmatprep.subr.bf16.mxu0 0
        %1884 = vmatpush1.bf16.msra.mxu0 0
        %1885 = vmatprep.subr.bf16.mxu0 0
        %1886 = vmatpush1.bf16.msra.mxu0 0
        %1887 = vmatprep.subr.bf16.mxu0 0
        %1888 = vmatpush1.bf16.msra.mxu0 0
        %1889 = vmatprep.subr.bf16.mxu0 0
        %1890 = vmatpush1.bf16.msra.mxu0 0
        %1891 = vmatprep.subr.bf16.mxu0 0
        %1892 = vmatpush1.bf16.msra.mxu0 0
        %1893 = vmatprep.subr.bf16.mxu0 0
        %1894 = vmatpush1.bf16.msra.mxu0 0
        %1895 = vmatprep.subr.bf16.mxu0 0
        %1896 = vmatpush1.bf16.msra.mxu0 0
        %1897 = vmatprep.subr.bf16.mxu0 0
        %1898 = vmatpush1.bf16.msra.mxu0 0
        %1899 = vmatprep.subr.bf16.mxu0 0
        %1900 = vmatpush1.bf16.msra.mxu0 0
        %1901 = vmatprep.subr.bf16.mxu0 0
        %1902 = vmatpush1.bf16.msra.mxu0 0
        %1903 = vmatprep.subr.bf16.mxu0 0
        %1904 = vmatpush1.bf16.msra.mxu0 0
        %1905 = vmatprep.subr.bf16.mxu0 0
        %1906 = vmatpush1.bf16.msra.mxu0 0
        %1907 = vmatprep.subr.bf16.mxu0 0
        %1908 = vmatpush1.bf16.msra.mxu0 0
        %1909 = vmatprep.mubr.bf16.mxu0 0
        %1910 = vmatmul.mubr.bf16.gmra.mrb[0].mxu0 %v1872
        %v1911 = vpop.f32.mrb[0].mxu0
        %v1912 = vadd.f32 0.0, %v1911
        %v1913 = vpop.f32.mrb[0].mxu0
        %v1914 = vpop.f32.mrb[0].mxu0
        %v1915 = vpop.f32.mrb[0].mxu0
        %1916 = vdwg.mxu0
        %v1918 = vsel %vm1334, %v1774, 0
        %v1921 = vsel %vm1589, %v1778, 0
        %1923 = vmatprep.subr.bf16.mxu0 0
        %1924 = vmatpush1.bf16.msra.mxu0 %v1921
        %1925 = vmatprep.subr.bf16.mxu0 0
        %1926 = vmatpush1.bf16.msra.mxu0 0
        %1927 = vmatprep.subr.bf16.mxu0 0
        %1928 = vmatpush1.bf16.msra.mxu0 0
        %1929 = vmatprep.subr.bf16.mxu0 0
        %1930 = vmatpush1.bf16.msra.mxu0 0
        %1931 = vmatprep.subr.bf16.mxu0 0
        %1932 = vmatpush1.bf16.msra.mxu0 0
        %1933 = vmatprep.subr.bf16.mxu0 0
        %1934 = vmatpush1.bf16.msra.mxu0 0
        %1935 = vmatprep.subr.bf16.mxu0 0
        %1936 = vmatpush1.bf16.msra.mxu0 0
        %1937 = vmatprep.subr.bf16.mxu0 0
        %1938 = vmatpush1.bf16.msra.mxu0 0
        %1939 = vmatprep.subr.bf16.mxu0 0
        %1940 = vmatpush1.bf16.msra.mxu0 0
        %1941 = vmatprep.subr.bf16.mxu0 0
        %1942 = vmatpush1.bf16.msra.mxu0 0
        %1943 = vmatprep.subr.bf16.mxu0 0
        %1944 = vmatpush1.bf16.msra.mxu0 0
        %1945 = vmatprep.subr.bf16.mxu0 0
        %1946 = vmatpush1.bf16.msra.mxu0 0
        %1947 = vmatprep.subr.bf16.mxu0 0
        %1948 = vmatpush1.bf16.msra.mxu0 0
        %1949 = vmatprep.subr.bf16.mxu0 0
        %1950 = vmatpush1.bf16.msra.mxu0 0
        %1951 = vmatprep.subr.bf16.mxu0 0
        %1952 = vmatpush1.bf16.msra.mxu0 0
        %1953 = vmatprep.subr.bf16.mxu0 0
        %1954 = vmatpush1.bf16.msra.mxu0 0
        %1955 = vmatprep.mubr.bf16.mxu0 0
        %1956 = vmatmul.mubr.bf16.gmra.mrb[0].mxu0 %v1918
        %v1957 = vpop.f32.mrb[0].mxu0
        %v1958 = vadd.f32 0.0, %v1957
        %v1959 = vpop.f32.mrb[0].mxu0
        %v1960 = vpop.f32.mrb[0].mxu0
        %v1961 = vpop.f32.mrb[0].mxu0
        %1962 = vdwg.mxu0
        %v1963 = vsel %vm537, %v1820, 0.0
        %v1964 = vsel %vm537, %v1866, 0.0
        %v1965 = vadd.f32 %v1963, %v1964
        %v1966 = vsel %vm537, %v1912, 0.0
        %v1967 = vadd.f32 %v1965, %v1966
        %v1968 = vsel %vm537, %v1958, 0.0
        %v1969 = vadd.f32 %v1967, %v1968
        %v1970 = vadd.f32 %v530, %v1969
        %v1971 = vlaneseq
        %v1972 = vshrl.u32 %v1971, 7
        %v1973 = vsub.s32 0, %v1972
        %v1974 = vrot.slane %v533, %v1973
        %v1975 = vadd.f32 %v1970, %v1974
        %v1976 = vsel %vm537, %v1975, 0.0
        %1977 = vadd.xlane.f32.xlu0 %v1976
        %v1978 = vpop.xlane.xlu0 %1977
        %v1979 = vmul.f32 %v1978, %v541
        %v1980 = vsub.f32 %v1975, %v1979
        %v1981 = vmul.f32 %v1980, %v1980
        %v1982 = vsel %vm537, %v1981, 0.0
        %1983 = vadd.xlane.f32.xlu0 %v1982
        %v1984 = vpop.xlane.xlu0 %1983
        %v1985 = vmul.f32 %v1984, %v541
        %v1986 = vadd.f32 %v1985, 1e-05
        %v1987 = vrsqrt.pop %v1986
        %v1988 = vmul.f32 %v1980, %v1987
        %v1989 = vlaneseq
        %v1990 = vshrl.u32 %v1989, 7
        %v1991 = vsub.s32 0, %v1990
        %v1992 = vrot.slane %v534, %v1991
        %v1993 = vmul.f32 %v1988, %v1992
        %v1994 = vlaneseq
        %v1995 = vshrl.u32 %v1994, 7
        %v1996 = vsub.s32 0, %v1995
        %v1997 = vrot.slane %v535, %v1996
        %v1998 = vadd.f32 %v1993, %v1997
        %v1999 = vpack.c.bf16 %v1998, %v1998
        %v2000 = vld [vmem:[%s509] sm:$0xf]
        %v2001 = vld [vmem:[%s509 + $0x4] sm:$0xf]
        %v2002 = vld [vmem:[%s509 + $0x8] sm:$0xf]
        %v2003 = vld [vmem:[%s509 + $0xc] sm:$0xf]
        %v2004 = vld [vmem:[%s512] sm:$0x1]
        %v2006 = vlaneseq
        %v2007 = vshrl.u32 %v2006, 7
        %v2008 = vsub.s32 0, %v2007
        %v2009 = vrot.slane %v2004, %v2008
        %v2015 = vunpack.c.l.b16 %v2000
        %v2016 = vunpack.c.l.b16 %v2001
        %v2017 = vunpack.c.l.b16 %v2002
        %v2018 = vunpack.c.l.b16 %v2003
        %v2019 = vpack.c.b16 %v2016, %v2015
        %v2020 = vpack.c.b16 %v2018, %v2017
        %v2024 = vsel %vm537, %v1999, 0
        %2026 = vmatprep.subr.bf16.mxu0 0
        %2027 = vmatpush1.bf16.msra.mxu0 %v2019
        %2028 = vmatprep.subr.bf16.mxu0 0
        %2029 = vmatpush1.bf16.msra.mxu0 %v2020
        %2030 = vmatprep.subr.bf16.mxu0 0
        %2031 = vmatpush1.bf16.msra.mxu0 0
        %2032 = vmatprep.subr.bf16.mxu0 0
        %2033 = vmatpush1.bf16.msra.mxu0 0
        %2034 = vmatprep.subr.bf16.mxu0 0
        %2035 = vmatpush1.bf16.msra.mxu0 0
        %2036 = vmatprep.subr.bf16.mxu0 0
        %2037 = vmatpush1.bf16.msra.mxu0 0
        %2038 = vmatprep.subr.bf16.mxu0 0
        %2039 = vmatpush1.bf16.msra.mxu0 0
        %2040 = vmatprep.subr.bf16.mxu0 0
        %2041 = vmatpush1.bf16.msra.mxu0 0
        %2042 = vmatprep.subr.bf16.mxu0 0
        %2043 = vmatpush1.bf16.msra.mxu0 0
        %2044 = vmatprep.subr.bf16.mxu0 0
        %2045 = vmatpush1.bf16.msra.mxu0 0
        %2046 = vmatprep.subr.bf16.mxu0 0
        %2047 = vmatpush1.bf16.msra.mxu0 0
        %2048 = vmatprep.subr.bf16.mxu0 0
        %2049 = vmatpush1.bf16.msra.mxu0 0
        %2050 = vmatprep.subr.bf16.mxu0 0
        %2051 = vmatpush1.bf16.msra.mxu0 0
        %2052 = vmatprep.subr.bf16.mxu0 0
        %2053 = vmatpush1.bf16.msra.mxu0 0
        %2054 = vmatprep.subr.bf16.mxu0 0
        %2055 = vmatpush1.bf16.msra.mxu0 0
        %2056 = vmatprep.subr.bf16.mxu0 0
        %2057 = vmatpush1.bf16.msra.mxu0 0
        %2058 = vmatprep.mubr.bf16.mxu0 0
        %2059 = vmatmul.mubr.bf16.gmra.mrb[0].mxu0 %v2024
        %v2060 = vpop.f32.mrb[0].mxu0
        %v2061 = vadd.f32 %v2009, %v2060
        %v2062 = vpop.f32.mrb[0].mxu0
        %v2063 = vpop.f32.mrb[0].mxu0
        %v2064 = vpop.f32.mrb[0].mxu0
        %2065 = vdwg.mxu0
        %v2066 = vmul.f32 %v2061, 0.5
        %v2067 = vmul.f32 %v2061, 0.044715
        %v2068 = vmul.f32 %v2067, %v2061
        %v2069 = vmul.f32 %v2068, %v2061
        %v2070 = vadd.f32 %v2061, %v2069
        %v2071 = vmul.f32 %v2070, 0.7978846
        %v2072 = vtanh.pop %v2071
        %v2073 = vadd.f32 %v2072, 1.0
        %v2074 = vmul.f32 %v2066, %v2073
        %v2075 = vpack.c.bf16 %v2074, %v2074
        %v2076 = vld [vmem:[%s517] sm:$0xf]
        %v2077 = vld [vmem:[%s517 + $0x4] sm:$0xf]
        %v2078 = vld [vmem:[%s517 + $0x8] sm:$0xf]
        %v2079 = vld [vmem:[%s517 + $0xc] sm:$0xf]
        %v2080 = vld [vmem:[%s517 + $0x10] sm:$0xf]
        %v2081 = vld [vmem:[%s517 + $0x14] sm:$0xf]
        %v2082 = vld [vmem:[%s517 + $0x18] sm:$0xf]
        %v2083 = vld [vmem:[%s517 + $0x1c] sm:$0xf]
        %v2084 = vld [vmem:[%s517 + $0x20] sm:$0xf]
        %v2085 = vld [vmem:[%s517 + $0x24] sm:$0xf]
        %v2086 = vld [vmem:[%s517 + $0x28] sm:$0xf]
        %v2087 = vld [vmem:[%s517 + $0x2c] sm:$0xf]
        %v2088 = vld [vmem:[%s517 + $0x30] sm:$0xf]
        %v2089 = vld [vmem:[%s517 + $0x34] sm:$0xf]
        %v2090 = vld [vmem:[%s517 + $0x38] sm:$0xf]
        %v2091 = vld [vmem:[%s517 + $0x3c] sm:$0xf]
        %v2108 = vunpack.c.l.b16 %v2076
        %v2109 = vunpack.c.l.b16 %v2077
        %v2110 = vunpack.c.l.b16 %v2078
        %v2111 = vunpack.c.l.b16 %v2079
        %v2112 = vunpack.c.l.b16 %v2080
        %v2113 = vunpack.c.l.b16 %v2081
        %v2114 = vunpack.c.l.b16 %v2082
        %v2115 = vunpack.c.l.b16 %v2083
        %v2116 = vunpack.c.l.b16 %v2084
        %v2117 = vunpack.c.l.b16 %v2085
        %v2118 = vunpack.c.l.b16 %v2086
        %v2119 = vunpack.c.l.b16 %v2087
        %v2120 = vunpack.c.l.b16 %v2088
        %v2121 = vunpack.c.l.b16 %v2089
        %v2122 = vunpack.c.l.b16 %v2090
        %v2123 = vunpack.c.l.b16 %v2091
        %v2124 = vpack.c.b16 %v2109, %v2108
        %v2125 = vpack.c.b16 %v2111, %v2110
        %v2126 = vpack.c.b16 %v2113, %v2112
        %v2127 = vpack.c.b16 %v2115, %v2114
        %v2128 = vpack.c.b16 %v2117, %v2116
        %v2129 = vpack.c.b16 %v2119, %v2118
        %v2130 = vpack.c.b16 %v2121, %v2120
        %v2131 = vpack.c.b16 %v2123, %v2122
        %2140 = vmatprep.subr.bf16.mxu0 0
        %2141 = vmatpush1.bf16.msra.mxu0 %v2124
        %2142 = vmatprep.subr.bf16.mxu0 0
        %2143 = vmatpush1.bf16.msra.mxu0 %v2125
        %2144 = vmatprep.subr.bf16.mxu0 0
        %2145 = vmatpush1.bf16.msra.mxu0 %v2126
        %2146 = vmatprep.subr.bf16.mxu0 0
        %2147 = vmatpush1.bf16.msra.mxu0 %v2127
        %2148 = vmatprep.subr.bf16.mxu0 0
        %2149 = vmatpush1.bf16.msra.mxu0 %v2128
        %2150 = vmatprep.subr.bf16.mxu0 0
        %2151 = vmatpush1.bf16.msra.mxu0 %v2129
        %2152 = vmatprep.subr.bf16.mxu0 0
        %2153 = vmatpush1.bf16.msra.mxu0 %v2130
        %2154 = vmatprep.subr.bf16.mxu0 0
        %2155 = vmatpush1.bf16.msra.mxu0 %v2131
        %2156 = vmatprep.subr.bf16.mxu0 0
        %2157 = vmatpush1.bf16.msra.mxu0 0
        %2158 = vmatprep.subr.bf16.mxu0 0
        %2159 = vmatpush1.bf16.msra.mxu0 0
        %2160 = vmatprep.subr.bf16.mxu0 0
        %2161 = vmatpush1.bf16.msra.mxu0 0
        %2162 = vmatprep.subr.bf16.mxu0 0
        %2163 = vmatpush1.bf16.msra.mxu0 0
        %2164 = vmatprep.subr.bf16.mxu0 0
        %2165 = vmatpush1.bf16.msra.mxu0 0
        %2166 = vmatprep.subr.bf16.mxu0 0
        %2167 = vmatpush1.bf16.msra.mxu0 0
        %2168 = vmatprep.subr.bf16.mxu0 0
        %2169 = vmatpush1.bf16.msra.mxu0 0
        %2170 = vmatprep.subr.bf16.mxu0 0
        %2171 = vmatpush1.bf16.msra.mxu0 0
        %2172 = vmatprep.mubr.bf16.mxu0 0
        %2173 = vmatmul.mubr.bf16.gmra.mrb[0].mxu0 %v2075
        %v2174 = vpop.f32.mrb[0].mxu0
        %v2175 = vadd.f32 0.0, %v2174
        %v2176 = vpop.f32.mrb[0].mxu0
        %v2177 = vpop.f32.mrb[0].mxu0
        %v2178 = vpop.f32.mrb[0].mxu0
        %2179 = vdwg.mxu0
        %v2180 = vadd.f32 %v1975, %v2175
        %v2181 = vlaneseq
        %v2182 = vshrl.u32 %v2181, 7
        %v2183 = vsub.s32 0, %v2182
        %v2184 = vrot.slane %v536, %v2183
        %v2185 = vadd.f32 %v2180, %v2184
        %2186 = vst.msk [vmem:[#allocation2] sm:$0xff] %vm537, %v2185
        %p2187 = scmp.eq.s32.totalorder %s30, 1
        // Predicated region
        $region69: #{tpu_custom_call.1} parent=63 // pred_check
          %p2188 = pneg %p2187
        $region70: #{tpu_custom_call.1} parent=63 // pred_check_branch
          %2190 = sbr.rel (%p2188) target = $region72
        $region71: #{tpu_custom_call.1} parent=63 // pred_region
          %v2191 = vld [vmem:[%s9] sm:$0x1]
          %v2192 = vld [vmem:[%s9 + $0x1] sm:$0x1]
          %v2193 = vsel %vm537, %v2185, 0.0
          %2194 = vadd.xlane.f32.xlu0 %v2193
          %v2195 = vpop.xlane.xlu0 %2194
          %v2196 = vmul.f32 %v2195, %v541
          %v2197 = vsub.f32 %v2185, %v2196
          %v2198 = vmul.f32 %v2197, %v2197
          %v2199 = vsel %vm537, %v2198, 0.0
          %2200 = vadd.xlane.f32.xlu0 %v2199
          %v2201 = vpop.xlane.xlu0 %2200
          %v2202 = vmul.f32 %v2201, %v541
          %v2203 = vadd.f32 %v2202, 1e-05
          %v2204 = vrsqrt.pop %v2203
          %v2205 = vmul.f32 %v2197, %v2204
          %v2206 = vlaneseq
          %v2207 = vshrl.u32 %v2206, 7
          %v2208 = vsub.s32 0, %v2207
          %v2209 = vrot.slane %v2191, %v2208
          %v2210 = vmul.f32 %v2205, %v2209
          %v2211 = vlaneseq
          %v2212 = vshrl.u32 %v2211, 7
          %v2213 = vsub.s32 0, %v2212
          %v2214 = vrot.slane %v2192, %v2213
          %v2215 = vadd.f32 %v2210, %v2214
          %v2216 = vpack.c.bf16 %v2215, %v2215
          %v2217 = vld [vmem:[%s8] sm:$0xff]
          %v2218 = vld [vmem:[%s8 + $0x8] sm:$0xff]
          %v2219 = vld [vmem:[%s8 + $0x10] sm:$0xff]
          %v2220 = vld [vmem:[%s8 + $0x18] sm:$0xff]
          %v2221 = vld [vmem:[%s10] sm:$0x3]
          %v2223 = vlaneseq
          %v2224 = vshrl.u32 %v2223, 7
          %v2225 = vsub.s32 0, %v2224
          %v2226 = vrot.slane %v2221, %v2225
          %v2227 = vlaneseq
          %v2228 = vshrl.u32 %v2227, 7
          %v2229 = vsub.s32 1, %v2228
          %v2230 = vrot.slane %v2221, %v2229
          %v2237 = vunpack.c.l.b16 %v2217
          %v2238 = vunpack.c.h.b16 %v2217
          %v2239 = vunpack.c.l.b16 %v2218
          %v2240 = vunpack.c.h.b16 %v2218
          %v2241 = vunpack.c.l.b16 %v2219
          %v2242 = vunpack.c.h.b16 %v2219
          %v2243 = vunpack.c.l.b16 %v2220
          %v2244 = vunpack.c.h.b16 %v2220
          %v2245 = vpack.c.b16 %v2239, %v2237
          %v2246 = vpack.c.b16 %v2240, %v2238
          %v2247 = vpack.c.b16 %v2243, %v2241
          %v2248 = vpack.c.b16 %v2244, %v2242
          %v2254 = vsel %vm537, %v2216, 0
          %2256 = vmatprep.subr.bf16.mxu0 %v2246
          %2257 = vmatpush1.bf16.msra.mxu0 %v2245
          %2258 = vmatprep.subr.bf16.mxu0 %v2248
          %2259 = vmatpush1.bf16.msra.mxu0 %v2247
          %2260 = vmatprep.subr.bf16.mxu0 0
          %2261 = vmatpush1.bf16.msra.mxu0 0
          %2262 = vmatprep.subr.bf16.mxu0 0
          %2263 = vmatpush1.bf16.msra.mxu0 0
          %2264 = vmatprep.subr.bf16.mxu0 0
          %2265 = vmatpush1.bf16.msra.mxu0 0
          %2266 = vmatprep.subr.bf16.mxu0 0
          %2267 = vmatpush1.bf16.msra.mxu0 0
          %2268 = vmatprep.subr.bf16.mxu0 0
          %2269 = vmatpush1.bf16.msra.mxu0 0
          %2270 = vmatprep.subr.bf16.mxu0 0
          %2271 = vmatpush1.bf16.msra.mxu0 0
          %2272 = vmatprep.subr.bf16.mxu0 0
          %2273 = vmatpush1.bf16.msra.mxu0 0
          %2274 = vmatprep.subr.bf16.mxu0 0
          %2275 = vmatpush1.bf16.msra.mxu0 0
          %2276 = vmatprep.subr.bf16.mxu0 0
          %2277 = vmatpush1.bf16.msra.mxu0 0
          %2278 = vmatprep.subr.bf16.mxu0 0
          %2279 = vmatpush1.bf16.msra.mxu0 0
          %2280 = vmatprep.subr.bf16.mxu0 0
          %2281 = vmatpush1.bf16.msra.mxu0 0
          %2282 = vmatprep.subr.bf16.mxu0 0
          %2283 = vmatpush1.bf16.msra.mxu0 0
          %2284 = vmatprep.subr.bf16.mxu0 0
          %2285 = vmatpush1.bf16.msra.mxu0 0
          %2286 = vmatprep.subr.bf16.mxu0 0
          %2287 = vmatpush1.bf16.msra.mxu0 0
          %2288 = vmatprep.mubr.bf16.mxu0 0
          %2289 = vmatmul.mubr.bf16.gmra.mrb[0].mxu0 %v2254
          %v2290 = vpop.f32.mrb[0].mxu0
          %v2291 = vadd.f32 %v2226, %v2290
          %v2292 = vpop.f32.mrb[0].mxu0
          %v2293 = vadd.f32 %v2230, %v2292
          %v2294 = vpop.f32.mrb[0].mxu0
          %v2295 = vpop.f32.mrb[0].mxu0
          %2296 = vdwg.mxu0
          %2297 = vst [vmem:[%s486] sm:$0xff] %v2291
          %2298 = vst [vmem:[%s486 + $0x8] sm:$0xff] %v2293
        $region72: #{tpu_custom_call.1} parent=63 // pred_fallthru
          _
        %s2299 = sand.u32 %s316, 1
        %s2300 = scalar_lea.sflag [#allocation4], %s2299
        %s2301 = sand.u32 %s316, 1
        %s2302 = smul.addr %s2301, 16
        %s2303 = scalar_lea.vmem [#allocation3], %s2302
        // Predicated region
        $region73: #{tpu_custom_call.1} parent=63 // pred_check
          %p2304 = pneg %p326
        $region74: #{tpu_custom_call.1} parent=63 // pred_check_branch
          %2306 = sbr.rel (%p2304) target = $region76
        $region75: #{tpu_custom_call.1} parent=63 // pred_region
          %s2308 = ssub.s32 256, 256
          %2309 = vsyncadd %s2300, %s2308
          %s2310 = smul.addr %s29, 2
          %s2311 = smul.addr %s2310, 128
          %s2312 = scalar_lea.hbm %s11, %s2311
          %s2314 = sshll.u32 %s2303, 4
          %s2315 = int_to_ptr.vmem [resolvable:$true] %s2314
          %2317 = dma.vmem_to_hbm [thread:$0]  %s2315, 256, %s2312, %s2300
        $region76: #{tpu_custom_call.1} parent=63 // pred_fallthru
          _
      $region64: #{tpu_custom_call.1} parent=5 // pred_fallthru
        _
      %p2318 = scmp.le.s32.totalorder 2, %s20
      // Predicated region
      $region77: #{tpu_custom_call.1} parent=5 // pred_check
        %p2319 = pneg %p2318
      $region78: #{tpu_custom_call.1} parent=5 // pred_check_branch
        %2321 = sbr.rel (%p2319) target = $region80
      $region79: #{tpu_custom_call.1} parent=5 // pred_region
        %s2322 = ssub.s32 %s20, 2
        // Predicated region
        $region81: #{tpu_custom_call.1} parent=79 // pred_check
          %p2323 = pneg %p332
        $region82: #{tpu_custom_call.1} parent=79 // pred_check_branch
          %2325 = sbr.rel (%p2323) target = $region84
        $region83: #{tpu_custom_call.1} parent=79 // pred_region
          %s2326 = sand.u32 %s317, 1
          %s2327 = scalar_lea.sflag [#allocation4], %s2326
          %s2328 = sand.u32 %s317, 1
          %s2329 = smul.addr %s2328, 16
          %s2330 = scalar_lea.vmem [#allocation3], %s2329
          %2331 = dma.done %s2327, 256
        $region84: #{tpu_custom_call.1} parent=79 // pred_fallthru
          _
      $region80: #{tpu_custom_call.1} parent=5 // pred_fallthru
        _
    $region6: #{tpu_custom_call.1} parent=1 // loop_footer
      %s24 = sadd.s32 1, %s20
    $region7: #{tpu_custom_call.1} parent=1 // loop_footer_branch
      %19 = sbr.rel target = $region3
    $region8: #{tpu_custom_call.1} parent=1 // loop_exit
      _
    %2332 = vsyncpa [#allocation4], 1
    %s2333 = scalar_lea.sflag [#allocation4], 1
    %2334 = vsyncpa %s2333, 1

</llo_original>
